<compile_context>
chip_gen: v6e
topology: v6e:2x2x1
jax: 0.10.0
libtpu: 0.0.40
codegen_flags: <defaults>
</compile_context>

<pallas_src>
import functools
import math

import jax
import jax.numpy as jnp
from jax.experimental import pallas as pl
from jax.experimental.pallas import tpu as pltpu


def _tabl_kernel(l_ref, x_ref, w1_ref, kw_ref, ks_ref, k2_ref, bg_ref, o_ref,
                 *, t1, t2):
    """One grid step = bblk samples, processed as nseg independent 128-lane
    panels (g = 128//t1 samples per panel). Everything stays lane-dense."""
    lam = l_ref[0]                                   # mixing scalar (SMEM, clamped)

    d2 = w1_ref.shape[0]
    g = 128 // t1                                    # samples per 128-lane panel
    gt2 = g * t2                                     # output lanes per panel
    nseg = x_ref.shape[1] // 128                     # panels in this block

    w1 = w1_ref[...]                                 # (d2, d1)    resident
    kw = kw_ref[...]                                 # (128, 128)  kron(I_g, W')
    ks = ks_ref[...]                                 # (128, 128)  kron(I_g, 1s), f32
    k2 = k2_ref[...]                                 # (128, g*t2) kron(I_g, W2)
    bg = bg_ref[...]                                 # (d2, g*t2)  bias tile, f32

    # Segment masks for the in-lane softmax max-reduce (shared by all panels).
    lane = jax.lax.broadcasted_iota(jnp.int32, (d2, 128), 1) % t1
    shift_masks = []
    s = 1
    while s < t1:
        shift_masks.append((s, lane >= s, lane < (t1 - s)))
        s *= 2

    for j in range(nseg):
        # ---- GEMM1: X1 = W1 @ X (columns layout, one 128-lane panel) -- MXU -
        xj = x_ref[:, j * 128:(j + 1) * 128]                        # (d1, 128)
        x1 = jnp.dot(w1, xj, preferred_element_type=jnp.float32)    # (d2, 128) f32

        # ---- GEMM2: E = X1 @ kron(I_g, W') (per-sample, within lanes) -- MXU
        e = jnp.dot(x1.astype(kw.dtype), kw,
                    preferred_element_type=jnp.float32)             # (d2, 128) f32

        # ---- segmented softmax over each t1-lane segment ---------------------
        # max: log2(t1) masked roll+max doubling steps (XLU + VPU, lane-dense).
        m = e
        for s, ok_lo, ok_hi in shift_masks:
            lo = pltpu.roll(m, shift=s, axis=1)          # value from lane l - s
            hi = pltpu.roll(m, shift=128 - s, axis=1)    # value from lane l + s
            m = jnp.maximum(m, jnp.where(ok_lo, lo, m))
            m = jnp.maximum(m, jnp.where(ok_hi, hi, m))
        p = jnp.exp(e - m)                                           # EUP
        # sum: matmul with kron(I_g, ones(t1,t1)) gives per-segment sums already
        # broadcast across the segment (MXU work; kept in f32 for accuracy).
        denom = jnp.dot(p, ks, preferred_element_type=jnp.float32)
        a = p / denom                                                # exact divide

        # ---- attention gating + GEMM3: y = (X1*(l+(1-l)A)) @ kron(I_g, W2) ---
        x2 = x1 * (lam + (1.0 - lam) * a)
        y = jnp.dot(x2.astype(k2.dtype), k2,
                    preferred_element_type=jnp.float32)              # (d2, g*t2)

        # ---- bias + store into the lane-dense columns output block -----------
        o_ref[:, j * gt2:(j + 1) * gt2] = (y + bg).astype(o_ref.dtype)


def _lcm(a, b):
    return a * b // math.gcd(a, b)


def _pick_bblk(batch, t1, t2, bblk):
    """Samples per grid step: a multiple of `bmult` so both the streamed input
    block (bblk*t1 lanes) and the output block (bblk*t2 lanes) are 128-dense,
    large enough to amortize the ~0.35us/step pipeline overhead, capped so the
    per-step VMEM footprint stays small on v7x, and split into >=2 steps when
    the batch allows (v7x has 2 TensorCores)."""
    bmult = _lcm(128 // math.gcd(128, t1), 128 // math.gcd(128, t2))
    if bblk is not None:
        return max(bmult, (bblk // bmult) * bmult)
    b_up = -(-batch // bmult) * bmult
    blk = min(256, b_up)
    blk = max(bmult, (blk // bmult) * bmult)
    if b_up // blk < 2 and b_up >= 2 * bmult:
        blk = max(bmult, (b_up // 2 // bmult) * bmult)
    return blk


def tabl_forward_cols(x_tm, w1, w, w2, bias, l, *, bblk=None,
                      mxu_dtype=jnp.bfloat16):
    """Time-major fast path: x_tm (d1, B, t1) -> y_tm (d2, B, t2).
    Supplying/consuming the time-major layout makes the batch-columns view a
    pure reshape (no host-side transpose, no extra HBM pass)."""
    d1, B, t1 = x_tm.shape
    d2 = w1.shape[0]
    t2 = w2.shape[1]
    if 128 % t1 != 0:
        # TODO(synk): pad t1 up to a divisor of 128 for fully general shapes.
        raise ValueError("t1 must divide 128")
    g = 128 // t1

    bblk = _pick_bblk(B, t1, t2, bblk)
    b_pad = -(-B // bblk) * bblk
    if b_pad != B:
        x_tm = jnp.pad(x_tm, ((0, 0), (0, b_pad - B), (0, 0)))

    # Streamed activations + MXU weight operands in mxu_dtype (bf16 default:
    # native MXU dtype on v6e/v7x and half the input HBM traffic); f32 accum.
    x_cols = x_tm.reshape(d1, b_pad * t1).astype(mxu_dtype)      # free reshape

    l_c = jnp.clip(l, 0.0, 1.0).astype(jnp.float32).reshape(1)

    # Hoisted constants: built once, resident in VMEM across the whole grid.
    eye = jnp.eye(t1, dtype=jnp.float32)
    w_f = w.astype(jnp.float32)
    wprime = w_f - w_f * eye + eye / t1
    eye_g = jnp.eye(g, dtype=jnp.float32)
    kw = jnp.kron(eye_g, wprime).astype(mxu_dtype)                     # (128, 128)
    ks = jnp.kron(eye_g, jnp.ones((t1, t1), jnp.float32))              # (128, 128)
    k2 = jnp.kron(eye_g, w2.astype(jnp.float32)).astype(mxu_dtype)     # (128, g*t2)
    bg = jnp.tile(bias.astype(jnp.float32), (1, g))                    # (d2, g*t2)
    w1_c = w1.astype(mxu_dtype)

    y_cols = pl.pallas_call(
        functools.partial(_tabl_kernel, t1=t1, t2=t2),
        out_shape=jax.ShapeDtypeStruct((d2, b_pad * t2), jnp.float32),
        grid=(b_pad // bblk,),
        in_specs=[
            pl.BlockSpec(memory_space=pltpu.SMEM),                # l  (1,)
            pl.BlockSpec((d1, bblk * t1), lambda i: (0, i)),      # X cols (streamed)
            pl.BlockSpec((d2, d1), lambda i: (0, 0)),             # W1      (resident)
            pl.BlockSpec((128, 128), lambda i: (0, 0)),           # kron(I_g, W')
            pl.BlockSpec((128, 128), lambda i: (0, 0)),           # kron(I_g, 1s)
            pl.BlockSpec((128, g * t2), lambda i: (0, 0)),        # kron(I_g, W2)
            pl.BlockSpec((d2, g * t2), lambda i: (0, 0)),         # bias tile
        ],
        out_specs=pl.BlockSpec((d2, bblk * t2), lambda i: (0, i)),
        compiler_params=pltpu.CompilerParams(
            dimension_semantics=("parallel",),
            vmem_limit_bytes=32 * 1024 * 1024),
    )(l_c, x_cols, w1_c, kw, ks, k2, bg)

    y_tm = y_cols.reshape(d2, b_pad, t2)                          # free reshape
    return y_tm[:, :B, :]


def tabl_forward(x, w1, w, w2, bias, l, *, bblk=None, mxu_dtype=jnp.bfloat16):
    """PyTorch-layout entry point: x (B, d1, t1) -> y (B, d2, t2).
    NOTE: this adapter pays one extra HBM pass over x and one over y for the
    batch<->time-major transposes; callers that can keep activations
    time-major should use tabl_forward_cols (zero-copy in and out)."""
    x_tm = jnp.transpose(x, (1, 0, 2))
    y_tm = tabl_forward_cols(x_tm, w1, w, w2, bias, l, bblk=bblk,
                             mxu_dtype=mxu_dtype)
    return jnp.transpose(y_tm, (1, 0, 2))


def reference_forward(x, w1, w, w2, bias, l):
    """Pure-JAX f32 reference mirroring the PyTorch module."""
    lc = jnp.clip(l, 0.0, 1.0)[0]
    t1 = w.shape[0]
    hp = jax.lax.Precision.HIGHEST
    X = jnp.einsum("ij,bjt->bit", w1, x, precision=hp)
    eye = jnp.eye(t1, dtype=jnp.float32)
    W = w - w * eye + eye / t1
    E = jnp.einsum("bit,ts->bis", X, W, precision=hp)
    A = jax.nn.softmax(E, axis=-1)
    X = lc * X + (1.0 - lc) * X * A
    return jnp.einsum("bit,ts->bis", X, w2, precision=hp) + bias[None]


if __name__ == "__main__":
    # Small shapes consistent with the module: X is (B, d1, t1).
    B, d1, t1, d2, t2 = 2, 32, 16, 64, 8

    key = jax.random.PRNGKey(0)
    kx, k1, k2_, kw_, kx2 = jax.random.split(key, 5)

    x = jax.random.normal(kx, (B, d1, t1), dtype=jnp.float32)

    # Deterministic parameter init mirroring the module's __init__.
    bound1 = math.sqrt(2.0) * math.sqrt(3.0 / d1)     # kaiming_uniform_, relu
    w1 = jax.random.uniform(k1, (d2, d1), jnp.float32, -bound1, bound1)
    bound2 = math.sqrt(2.0) * math.sqrt(3.0 / t2)
    w2 = jax.random.uniform(k2_, (t1, t2), jnp.float32, -bound2, bound2)
    # W is initialised to 1/t1 in the module; perturb it slightly so the
    # softmax / attention path is actually exercised (constant W -> uniform A).
    w = 1.0 / t1 + 0.02 * jax.random.normal(kw_, (t1, t1), dtype=jnp.float32)
    bias = jnp.zeros((d2, t2), dtype=jnp.float32)
    l = jnp.array([0.5], dtype=jnp.float32)

    y_ref = reference_forward(x, w1, w, w2, bias, l)

    # f32 MXU operands: tight check against the f32 reference.
    y32 = jax.block_until_ready(
        tabl_forward(x, w1, w, w2, bias, l, mxu_dtype=jnp.float32))
    assert y32.shape == (B, d2, t2)
    assert jnp.allclose(y32, y_ref, atol=2e-3, rtol=2e-3), "f32 path mismatch"

    # bf16 MXU operands (default; native MXU dtype on v6e/v7x): looser
    # tolerance reflecting bf16 operand rounding on O(1)-magnitude outputs.
    ybf = jax.block_until_ready(tabl_forward(x, w1, w, w2, bias, l))
    assert jnp.allclose(ybf, y_ref, atol=1e-1, rtol=5e-2), "bf16 path mismatch"

    # Larger batch: exercises multi-step grid, batch padding and l clamping.
    B2 = 40
    x2 = jax.random.normal(kx2, (B2, d1, t1), dtype=jnp.float32)
    l2 = jnp.array([1.3], dtype=jnp.float32)          # forward clamps to 1.0
    y2 = jax.block_until_ready(
        tabl_forward(x2, w1, w, w2, bias, l2, mxu_dtype=jnp.float32))
    y2_ref = reference_forward(x2, w1, w, w2, bias, l2)
    assert y2.shape == (B2, d2, t2)
    assert jnp.allclose(y2, y2_ref, atol=2e-3, rtol=2e-3), "batched path mismatch"

    print("KERNEL_OK")
</pallas_src>

<mosaic_0001>
module attributes {stable_mosaic.version = 11 : i64} {
  func.func @_tabl_kernel(%arg0: i32, %arg1: memref<1xf32, #tpu.memory_space<smem>>, %arg2: memref<32x256xf32, #tpu.memory_space<vmem>>, %arg3: memref<64x32xf32, #tpu.memory_space<vmem>>, %arg4: memref<128x128xf32, #tpu.memory_space<vmem>>, %arg5: memref<128x128xf32, #tpu.memory_space<vmem>>, %arg6: memref<128x64xf32, #tpu.memory_space<vmem>>, %arg7: memref<64x64xf32, #tpu.memory_space<vmem>>, %arg8: memref<64x128xf32, #tpu.memory_space<vmem>>) attributes {dimension_semantics = [#tpu.dimension_semantics<parallel>], iteration_bounds = array<i64: 1>, scalar_prefetch = 0 : i64, scratch_operands = 0 : i64, tpu.core_type = #tpu.core_type<tc>, window_params = [{transform_indices = @transform_0, window_bounds = array<i64: 1>}, {transform_indices = @transform_1, window_bounds = array<i64: 32, 256>}, {pipeline_mode = #tpu.pipeline_mode<synchronous>, transform_indices = @transform_2, window_bounds = array<i64: 64, 32>}, {pipeline_mode = #tpu.pipeline_mode<synchronous>, transform_indices = @transform_3, window_bounds = array<i64: 128, 128>}, {pipeline_mode = #tpu.pipeline_mode<synchronous>, transform_indices = @transform_4, window_bounds = array<i64: 128, 128>}, {pipeline_mode = #tpu.pipeline_mode<synchronous>, transform_indices = @transform_5, window_bounds = array<i64: 128, 64>}, {pipeline_mode = #tpu.pipeline_mode<synchronous>, transform_indices = @transform_6, window_bounds = array<i64: 64, 64>}, {transform_indices = @transform_7, window_bounds = array<i64: 64, 128>}]} {
    %c0 = arith.constant 0 : index
    %0 = memref.load %arg1[%c0] : memref<1xf32, #tpu.memory_space<smem>>
    %c0_0 = arith.constant 0 : index
    %c0_1 = arith.constant 0 : index
    %1 = vector.load %arg3[%c0_0, %c0_1] : memref<64x32xf32, #tpu.memory_space<vmem>>, vector<64x32xf32>
    %c0_2 = arith.constant 0 : index
    %c0_3 = arith.constant 0 : index
    %2 = vector.load %arg4[%c0_2, %c0_3] : memref<128x128xf32, #tpu.memory_space<vmem>>, vector<128x128xf32>
    %c0_4 = arith.constant 0 : index
    %c0_5 = arith.constant 0 : index
    %3 = vector.load %arg5[%c0_4, %c0_5] : memref<128x128xf32, #tpu.memory_space<vmem>>, vector<128x128xf32>
    %c0_6 = arith.constant 0 : index
    %c0_7 = arith.constant 0 : index
    %4 = vector.load %arg6[%c0_6, %c0_7] : memref<128x64xf32, #tpu.memory_space<vmem>>, vector<128x64xf32>
    %c0_8 = arith.constant 0 : index
    %c0_9 = arith.constant 0 : index
    %5 = vector.load %arg7[%c0_8, %c0_9] : memref<64x64xf32, #tpu.memory_space<vmem>>, vector<64x64xf32>
    %6 = tpu.iota {dimensions = array<i32: 1>} : vector<64x128xi32>
    %c16_i32 = arith.constant 16 : i32
    %c0_i32 = arith.constant 0 : i32
    %7 = arith.cmpi eq, %c16_i32, %c0_i32 : i32
    %c1_i32 = arith.constant 1 : i32
    %8 = arith.select %7, %c1_i32, %c16_i32 : i32
    %9 = vector.broadcast %8 : i32 to vector<64x128xi32>
    %10 = arith.remsi %6, %9 : vector<64x128xi32>
    %c0_i32_10 = arith.constant 0 : i32
    %11 = vector.broadcast %c0_i32_10 : i32 to vector<64x128xi32>
    %12 = arith.cmpi ne, %10, %11 : vector<64x128xi32>
    %c0_i32_11 = arith.constant 0 : i32
    %13 = vector.broadcast %c0_i32_11 : i32 to vector<64x128xi32>
    %14 = arith.cmpi slt, %10, %13 : vector<64x128xi32>
    %c0_i32_12 = arith.constant 0 : i32
    %15 = arith.cmpi slt, %8, %c0_i32_12 : i32
    %16 = vector.broadcast %15 : i1 to vector<64x128xi1>
    %17 = vector.broadcast %16 : vector<64x128xi1> to vector<64x128xi1>
    %18 = arith.xori %14, %17 : vector<64x128xi1>
    %19 = arith.andi %18, %12 : vector<64x128xi1>
    %20 = vector.broadcast %8 : i32 to vector<64x128xi32>
    %21 = arith.addi %10, %20 : vector<64x128xi32>
    %22 = arith.select %19, %21, %10 : vector<64x128xi1>, vector<64x128xi32>
    %c1_i32_13 = arith.constant 1 : i32
    %23 = vector.broadcast %c1_i32_13 : i32 to vector<64x128xi32>
    %24 = arith.cmpi sge, %22, %23 : vector<64x128xi32>
    %c15_i32 = arith.constant 15 : i32
    %25 = vector.broadcast %c15_i32 : i32 to vector<64x128xi32>
    %26 = arith.cmpi slt, %22, %25 : vector<64x128xi32>
    %c2_i32 = arith.constant 2 : i32
    %27 = vector.broadcast %c2_i32 : i32 to vector<64x128xi32>
    %28 = arith.cmpi sge, %22, %27 : vector<64x128xi32>
    %c14_i32 = arith.constant 14 : i32
    %29 = vector.broadcast %c14_i32 : i32 to vector<64x128xi32>
    %30 = arith.cmpi slt, %22, %29 : vector<64x128xi32>
    %c4_i32 = arith.constant 4 : i32
    %31 = vector.broadcast %c4_i32 : i32 to vector<64x128xi32>
    %32 = arith.cmpi sge, %22, %31 : vector<64x128xi32>
    %c12_i32 = arith.constant 12 : i32
    %33 = vector.broadcast %c12_i32 : i32 to vector<64x128xi32>
    %34 = arith.cmpi slt, %22, %33 : vector<64x128xi32>
    %c8_i32 = arith.constant 8 : i32
    %35 = vector.broadcast %c8_i32 : i32 to vector<64x128xi32>
    %36 = arith.cmpi sge, %22, %35 : vector<64x128xi32>
    %c8_i32_14 = arith.constant 8 : i32
    %37 = vector.broadcast %c8_i32_14 : i32 to vector<64x128xi32>
    %38 = arith.cmpi slt, %22, %37 : vector<64x128xi32>
    %c0_15 = arith.constant 0 : index
    %c0_16 = arith.constant 0 : index
    %39 = vector.load %arg2[%c0_15, %c0_16] : memref<32x256xf32, #tpu.memory_space<vmem>>, vector<32x128xf32>
    %cst = arith.constant dense<0.000000e+00> : vector<64x128xf32>
    %40 = tpu.matmul %1, %39, %cst {dimension_numbers = #tpu.dot_dimension_numbers<[1], [0], [0], [1], [0, 0, 1, 1], [], []>} : vector<64x32xf32>, vector<32x128xf32>, vector<64x128xf32> -> vector<64x128xf32>
    %cst_17 = arith.constant dense<0.000000e+00> : vector<64x128xf32>
    %41 = tpu.matmul %40, %2, %cst_17 {dimension_numbers = #tpu.dot_dimension_numbers<[1], [0], [0], [1], [0, 0, 1, 1], [], []>} : vector<64x128xf32>, vector<128x128xf32>, vector<64x128xf32> -> vector<64x128xf32>
    %c1_i32_18 = arith.constant 1 : i32
    %42 = tpu.dynamic_rotate %41 by %c1_i32_18 dim 1 : vector<64x128xf32>, i32 -> vector<64x128xf32>
    %c127_i32 = arith.constant 127 : i32
    %43 = tpu.dynamic_rotate %41 by %c127_i32 dim 1 : vector<64x128xf32>, i32 -> vector<64x128xf32>
    %44 = arith.select %24, %42, %41 : vector<64x128xi1>, vector<64x128xf32>
    %45 = arith.maximumf %41, %44 : vector<64x128xf32>
    %46 = arith.select %26, %43, %45 : vector<64x128xi1>, vector<64x128xf32>
    %47 = arith.maximumf %45, %46 : vector<64x128xf32>
    %c2_i32_19 = arith.constant 2 : i32
    %48 = tpu.dynamic_rotate %47 by %c2_i32_19 dim 1 : vector<64x128xf32>, i32 -> vector<64x128xf32>
    %c126_i32 = arith.constant 126 : i32
    %49 = tpu.dynamic_rotate %47 by %c126_i32 dim 1 : vector<64x128xf32>, i32 -> vector<64x128xf32>
    %50 = arith.select %28, %48, %47 : vector<64x128xi1>, vector<64x128xf32>
    %51 = arith.maximumf %47, %50 : vector<64x128xf32>
    %52 = arith.select %30, %49, %51 : vector<64x128xi1>, vector<64x128xf32>
    %53 = arith.maximumf %51, %52 : vector<64x128xf32>
    %c4_i32_20 = arith.constant 4 : i32
    %54 = tpu.dynamic_rotate %53 by %c4_i32_20 dim 1 : vector<64x128xf32>, i32 -> vector<64x128xf32>
    %c124_i32 = arith.constant 124 : i32
    %55 = tpu.dynamic_rotate %53 by %c124_i32 dim 1 : vector<64x128xf32>, i32 -> vector<64x128xf32>
    %56 = arith.select %32, %54, %53 : vector<64x128xi1>, vector<64x128xf32>
    %57 = arith.maximumf %53, %56 : vector<64x128xf32>
    %58 = arith.select %34, %55, %57 : vector<64x128xi1>, vector<64x128xf32>
    %59 = arith.maximumf %57, %58 : vector<64x128xf32>
    %c8_i32_21 = arith.constant 8 : i32
    %60 = tpu.dynamic_rotate %59 by %c8_i32_21 dim 1 : vector<64x128xf32>, i32 -> vector<64x128xf32>
    %c120_i32 = arith.constant 120 : i32
    %61 = tpu.dynamic_rotate %59 by %c120_i32 dim 1 : vector<64x128xf32>, i32 -> vector<64x128xf32>
    %62 = arith.select %36, %60, %59 : vector<64x128xi1>, vector<64x128xf32>
    %63 = arith.maximumf %59, %62 : vector<64x128xf32>
    %64 = arith.select %38, %61, %63 : vector<64x128xi1>, vector<64x128xf32>
    %65 = arith.maximumf %63, %64 : vector<64x128xf32>
    %66 = arith.subf %41, %65 : vector<64x128xf32>
    %67 = math.exp %66 : vector<64x128xf32>
    %cst_22 = arith.constant dense<0.000000e+00> : vector<64x128xf32>
    %68 = tpu.matmul %67, %3, %cst_22 {dimension_numbers = #tpu.dot_dimension_numbers<[1], [0], [0], [1], [0, 0, 1, 1], [], []>} : vector<64x128xf32>, vector<128x128xf32>, vector<64x128xf32> -> vector<64x128xf32>
    %69 = arith.divf %67, %68 : vector<64x128xf32>
    %cst_23 = arith.constant 1.000000e+00 : f32
    %70 = arith.subf %cst_23, %0 : f32
    %71 = vector.broadcast %70 : f32 to vector<64x128xf32>
    %72 = arith.mulf %71, %69 : vector<64x128xf32>
    %73 = vector.broadcast %0 : f32 to vector<64x128xf32>
    %74 = arith.addf %73, %72 : vector<64x128xf32>
    %75 = arith.mulf %40, %74 : vector<64x128xf32>
    %cst_24 = arith.constant dense<0.000000e+00> : vector<64x64xf32>
    %76 = tpu.matmul %75, %4, %cst_24 {dimension_numbers = #tpu.dot_dimension_numbers<[1], [0], [0], [1], [0, 0, 1, 1], [], []>} : vector<64x128xf32>, vector<128x64xf32>, vector<64x64xf32> -> vector<64x64xf32>
    %77 = arith.addf %76, %5 : vector<64x64xf32>
    %c0_25 = arith.constant 0 : index
    %c0_26 = arith.constant 0 : index
    %78 = vector.load %arg8[%c0_25, %c0_26] : memref<64x128xf32, #tpu.memory_space<vmem>>, vector<64x64xf32>
    tpu.vector_store %arg8[%c0_25, %c0_26], %77 {strides = array<i32>} : memref<64x128xf32, #tpu.memory_space<vmem>>, vector<64x64xf32>,
    %c0_27 = arith.constant 0 : index
    %c128 = arith.constant 128 : index
    %79 = vector.load %arg2[%c0_27, %c128] : memref<32x256xf32, #tpu.memory_space<vmem>>, vector<32x128xf32>
    %cst_28 = arith.constant dense<0.000000e+00> : vector<64x128xf32>
    %80 = tpu.matmul %1, %79, %cst_28 {dimension_numbers = #tpu.dot_dimension_numbers<[1], [0], [0], [1], [0, 0, 1, 1], [], []>} : vector<64x32xf32>, vector<32x128xf32>, vector<64x128xf32> -> vector<64x128xf32>
    %cst_29 = arith.constant dense<0.000000e+00> : vector<64x128xf32>
    %81 = tpu.matmul %80, %2, %cst_29 {dimension_numbers = #tpu.dot_dimension_numbers<[1], [0], [0], [1], [0, 0, 1, 1], [], []>} : vector<64x128xf32>, vector<128x128xf32>, vector<64x128xf32> -> vector<64x128xf32>
    %c1_i32_30 = arith.constant 1 : i32
    %82 = tpu.dynamic_rotate %81 by %c1_i32_30 dim 1 : vector<64x128xf32>, i32 -> vector<64x128xf32>
    %c127_i32_31 = arith.constant 127 : i32
    %83 = tpu.dynamic_rotate %81 by %c127_i32_31 dim 1 : vector<64x128xf32>, i32 -> vector<64x128xf32>
    %84 = arith.select %24, %82, %81 : vector<64x128xi1>, vector<64x128xf32>
    %85 = arith.maximumf %81, %84 : vector<64x128xf32>
    %86 = arith.select %26, %83, %85 : vector<64x128xi1>, vector<64x128xf32>
    %87 = arith.maximumf %85, %86 : vector<64x128xf32>
    %c2_i32_32 = arith.constant 2 : i32
    %88 = tpu.dynamic_rotate %87 by %c2_i32_32 dim 1 : vector<64x128xf32>, i32 -> vector<64x128xf32>
    %c126_i32_33 = arith.constant 126 : i32
    %89 = tpu.dynamic_rotate %87 by %c126_i32_33 dim 1 : vector<64x128xf32>, i32 -> vector<64x128xf32>
    %90 = arith.select %28, %88, %87 : vector<64x128xi1>, vector<64x128xf32>
    %91 = arith.maximumf %87, %90 : vector<64x128xf32>
    %92 = arith.select %30, %89, %91 : vector<64x128xi1>, vector<64x128xf32>
    %93 = arith.maximumf %91, %92 : vector<64x128xf32>
    %c4_i32_34 = arith.constant 4 : i32
    %94 = tpu.dynamic_rotate %93 by %c4_i32_34 dim 1 : vector<64x128xf32>, i32 -> vector<64x128xf32>
    %c124_i32_35 = arith.constant 124 : i32
    %95 = tpu.dynamic_rotate %93 by %c124_i32_35 dim 1 : vector<64x128xf32>, i32 -> vector<64x128xf32>
    %96 = arith.select %32, %94, %93 : vector<64x128xi1>, vector<64x128xf32>
    %97 = arith.maximumf %93, %96 : vector<64x128xf32>
    %98 = arith.select %34, %95, %97 : vector<64x128xi1>, vector<64x128xf32>
    %99 = arith.maximumf %97, %98 : vector<64x128xf32>
    %c8_i32_36 = arith.constant 8 : i32
    %100 = tpu.dynamic_rotate %99 by %c8_i32_36 dim 1 : vector<64x128xf32>, i32 -> vector<64x128xf32>
    %c120_i32_37 = arith.constant 120 : i32
    %101 = tpu.dynamic_rotate %99 by %c120_i32_37 dim 1 : vector<64x128xf32>, i32 -> vector<64x128xf32>
    %102 = arith.select %36, %100, %99 : vector<64x128xi1>, vector<64x128xf32>
    %103 = arith.maximumf %99, %102 : vector<64x128xf32>
    %104 = arith.select %38, %101, %103 : vector<64x128xi1>, vector<64x128xf32>
    %105 = arith.maximumf %103, %104 : vector<64x128xf32>
    %106 = arith.subf %81, %105 : vector<64x128xf32>
    %107 = math.exp %106 : vector<64x128xf32>
    %cst_38 = arith.constant dense<0.000000e+00> : vector<64x128xf32>
    %108 = tpu.matmul %107, %3, %cst_38 {dimension_numbers = #tpu.dot_dimension_numbers<[1], [0], [0], [1], [0, 0, 1, 1], [], []>} : vector<64x128xf32>, vector<128x128xf32>, vector<64x128xf32> -> vector<64x128xf32>
    %109 = arith.divf %107, %108 : vector<64x128xf32>
    %cst_39 = arith.constant 1.000000e+00 : f32
    %110 = arith.subf %cst_39, %0 : f32
    %111 = vector.broadcast %110 : f32 to vector<64x128xf32>
    %112 = arith.mulf %111, %109 : vector<64x128xf32>
    %113 = vector.broadcast %0 : f32 to vector<64x128xf32>
    %114 = arith.addf %113, %112 : vector<64x128xf32>
    %115 = arith.mulf %80, %114 : vector<64x128xf32>
    %cst_40 = arith.constant dense<0.000000e+00> : vector<64x64xf32>
    %116 = tpu.matmul %115, %4, %cst_40 {dimension_numbers = #tpu.dot_dimension_numbers<[1], [0], [0], [1], [0, 0, 1, 1], [], []>} : vector<64x128xf32>, vector<128x64xf32>, vector<64x64xf32> -> vector<64x64xf32>
    %117 = arith.addf %116, %5 : vector<64x64xf32>
    %c0_41 = arith.constant 0 : index
    %c64 = arith.constant 64 : index
    %118 = vector.load %arg8[%c0_41, %c64] : memref<64x128xf32, #tpu.memory_space<vmem>>, vector<64x64xf32>
    tpu.vector_store %arg8[%c0_41, %c64], %117 {strides = array<i32>} : memref<64x128xf32, #tpu.memory_space<vmem>>, vector<64x64xf32>,
    return
  }
  func.func @transform_0(%arg0: i32) -> i32 {
    %c0_i32 = arith.constant 0 : i32
    %c0_i32_0 = arith.constant 0 : i32
    return %c0_i32 : i32
  }
  func.func @transform_1(%arg0: i32) -> (i32, i32) {
    %c0_i32 = arith.constant 0 : i32
    %c0_i32_0 = arith.constant 0 : i32
    return %c0_i32, %arg0 : i32, i32
  }
  func.func @transform_2(%arg0: i32) -> (i32, i32) {
    %c0_i32 = arith.constant 0 : i32
    %c0_i32_0 = arith.constant 0 : i32
    %c0_i32_1 = arith.constant 0 : i32
    return %c0_i32, %c0_i32_0 : i32, i32
  }
  func.func @transform_3(%arg0: i32) -> (i32, i32) {
    %c0_i32 = arith.constant 0 : i32
    %c0_i32_0 = arith.constant 0 : i32
    %c0_i32_1 = arith.constant 0 : i32
    return %c0_i32, %c0_i32_0 : i32, i32
  }
  func.func @transform_4(%arg0: i32) -> (i32, i32) {
    %c0_i32 = arith.constant 0 : i32
    %c0_i32_0 = arith.constant 0 : i32
    %c0_i32_1 = arith.constant 0 : i32
    return %c0_i32, %c0_i32_0 : i32, i32
  }
  func.func @transform_5(%arg0: i32) -> (i32, i32) {
    %c0_i32 = arith.constant 0 : i32
    %c0_i32_0 = arith.constant 0 : i32
    %c0_i32_1 = arith.constant 0 : i32
    return %c0_i32, %c0_i32_0 : i32, i32
  }
  func.func @transform_6(%arg0: i32) -> (i32, i32) {
    %c0_i32 = arith.constant 0 : i32
    %c0_i32_0 = arith.constant 0 : i32
    %c0_i32_1 = arith.constant 0 : i32
    return %c0_i32, %c0_i32_0 : i32, i32
  }
  func.func @transform_7(%arg0: i32) -> (i32, i32) {
    %c0_i32 = arith.constant 0 : i32
    %c0_i32_0 = arith.constant 0 : i32
    return %c0_i32, %arg0 : i32, i32
  }
}

</mosaic_0001>

<llo_original>
// kernel: tpu_custom_call.1
$region0: #{tpu_custom_call.1}
  #allocation0 [shape = 'u32[]', space=smem, size = 0x4, offset = 0x4, fixed_abs, tag = 'smem constant byte address 0x4 - core index']
  #allocation1 [shape = 'u32[144,128]{1,0:T(1,128)}', space=vmem, size = 0x12000, scoped, tag = 'internal scratch']
  #allocation2 [shape = 'f32[1]{0:T(128)S(6)}', space=smem, size = 0x200, scoped, tag = 'scoped memory for tpu_custom_call.1']
  %s0 = inlined_call_operand.<no memory space> [shape: f32[1], index: 0, kind: input, shape index: {}]
  %s1 = inlined_call_operand.hbm [shape: f32[32,256], index: 1, kind: input, shape index: {}]
  %s2 = inlined_call_operand.vmem [shape: f32[64,32], index: 2, kind: input, shape index: {}]
  %s3 = inlined_call_operand.vmem [shape: f32[128,128], index: 3, kind: input, shape index: {}]
  %s4 = inlined_call_operand.vmem [shape: f32[128,128], index: 4, kind: input, shape index: {}]
  %s5 = inlined_call_operand.vmem [shape: f32[128,64], index: 5, kind: input, shape index: {}]
  %s6 = inlined_call_operand.hbm [shape: f32[64,64], index: 6, kind: input, shape index: {}]
  %s7 = inlined_call_operand.hbm [shape: f32[64,128], index: 7, kind: output, shape index: {}]
  %s8 = sld [smem:[#allocation0]]
  $region46: #{tpu_custom_call.1} parent=0
    _
  %s10 = ssub.s32 1, %s8
  %s11 = scalar_select 0, %s10, %s8
  %12 = sst [smem:[#allocation2]] %s0
  $region1: #{tpu_custom_call.1} parent=0
    #allocation3 [shape = 'u8[32768]{0}', space=vmem, size = 0x8000, scoped, tag = 'input window, operand 1, single buffered']
    #allocation4 [shape = 's32[1]{0}', space=sflag, size = 0x4, scoped, tag = 'scoped memory for tpu_custom_call.1']
    #allocation5 [shape = 's32[1]{0}', space=sflag, size = 0x4, scoped, tag = 'scoped memory for tpu_custom_call.1']
    #allocation6 [shape = 'u8[32768]{0}', space=vmem, size = 0x8000, scoped, tag = 'input window, operand 6, single buffered']
    #allocation7 [shape = 's32[1]{0}', space=sflag, size = 0x4, scoped, tag = 'scoped memory for tpu_custom_call.1']
    #allocation8 [shape = 'u8[32768]{0}', space=vmem, size = 0x8000, scoped, tag = 'output window, operand 0, single buffered']
    %13 = vsyncpa [#allocation4], 0
    %14 = vsyncpa [#allocation7], 0
    %15 = vsyncpa [#allocation5], 0
    // Predicated region
    $region2: #{tpu_custom_call.1} parent=1 // pred_check
      _
    $region3: #{tpu_custom_call.1} parent=1 // pred_check_branch
      %17 = sbr.rel (0) target = $region5
    $region4: #{tpu_custom_call.1} parent=1 // pred_region
      _
    $region5: #{tpu_custom_call.1} parent=1 // pred_fallthru
      _
    // Predicated region
    $region6: #{tpu_custom_call.1} parent=1 // pred_check
      _
    $region7: #{tpu_custom_call.1} parent=1 // pred_check_branch
      %19 = sbr.rel (0) target = $region9
    $region8: #{tpu_custom_call.1} parent=1 // pred_region
      %s21 = ssub.s32 1024, 1024
      %22 = vsyncadd [#allocation4], %s21
      %s23 = sshll.u32 [#allocation3], 4
      %s24 = int_to_ptr.vmem [resolvable:$true] %s23
      %29 = dma.hbm_to_vmem [thread:$0]  %s1, 1024, %s24, [#allocation4], 256, 256, 16
    $region9: #{tpu_custom_call.1} parent=1 // pred_fallthru
      _
    // Predicated region
    $region10: #{tpu_custom_call.1} parent=1 // pred_check
      _
    $region11: #{tpu_custom_call.1} parent=1 // pred_check_branch
      %31 = sbr.rel (0) target = $region13
    $region12: #{tpu_custom_call.1} parent=1 // pred_region
      _
    $region13: #{tpu_custom_call.1} parent=1 // pred_fallthru
      _
    // Predicated region
    $region14: #{tpu_custom_call.1} parent=1 // pred_check
      _
    $region15: #{tpu_custom_call.1} parent=1 // pred_check_branch
      %33 = sbr.rel (0) target = $region17
    $region16: #{tpu_custom_call.1} parent=1 // pred_region
      _
    $region17: #{tpu_custom_call.1} parent=1 // pred_fallthru
      _
    // Predicated region
    $region18: #{tpu_custom_call.1} parent=1 // pred_check
      _
    $region19: #{tpu_custom_call.1} parent=1 // pred_check_branch
      %35 = sbr.rel (0) target = $region21
    $region20: #{tpu_custom_call.1} parent=1 // pred_region
      _
    $region21: #{tpu_custom_call.1} parent=1 // pred_fallthru
      _
    // Predicated region
    $region22: #{tpu_custom_call.1} parent=1 // pred_check
      _
    $region23: #{tpu_custom_call.1} parent=1 // pred_check_branch
      %37 = sbr.rel (0) target = $region25
    $region24: #{tpu_custom_call.1} parent=1 // pred_region
      _
    $region25: #{tpu_custom_call.1} parent=1 // pred_fallthru
      _
    // Predicated region
    $region26: #{tpu_custom_call.1} parent=1 // pred_check
      _
    $region27: #{tpu_custom_call.1} parent=1 // pred_check_branch
      %39 = sbr.rel (0) target = $region29
    $region28: #{tpu_custom_call.1} parent=1 // pred_region
      %s41 = ssub.s32 1024, 1024
      %42 = vsyncadd [#allocation7], %s41
      %s43 = sshll.u32 [#allocation6], 4
      %s44 = int_to_ptr.vmem [resolvable:$true] %s43
      %49 = dma.hbm_to_vmem [thread:$0]  %s6, 1024, %s44, [#allocation7], 128, 128, 8
    $region29: #{tpu_custom_call.1} parent=1 // pred_fallthru
      _
    // Predicated region
    $region30: #{tpu_custom_call.1} parent=1 // pred_check
      _
    $region31: #{tpu_custom_call.1} parent=1 // pred_check_branch
      %51 = sbr.rel (0) target = $region33
    $region32: #{tpu_custom_call.1} parent=1 // pred_region
      %52 = dma.done [#allocation4], 1024
    $region33: #{tpu_custom_call.1} parent=1 // pred_fallthru
      _
    // Predicated region
    $region34: #{tpu_custom_call.1} parent=1 // pred_check
      _
    $region35: #{tpu_custom_call.1} parent=1 // pred_check_branch
      %54 = sbr.rel (0) target = $region37
    $region36: #{tpu_custom_call.1} parent=1 // pred_region
      %55 = dma.done [#allocation7], 1024
    $region37: #{tpu_custom_call.1} parent=1 // pred_fallthru
      _
    %s56 = sld [smem:[#allocation2]]
    %v57 = vld [vmem:[%s2] sm:$0xff]
    %v58 = vld [vmem:[%s2 + $0x8] sm:$0xff]
    %v59 = vld [vmem:[%s2 + $0x10] sm:$0xff]
    %v60 = vld [vmem:[%s2 + $0x18] sm:$0xff]
    %v61 = vld [vmem:[%s2 + $0x20] sm:$0xff]
    %v62 = vld [vmem:[%s2 + $0x28] sm:$0xff]
    %v63 = vld [vmem:[%s2 + $0x30] sm:$0xff]
    %v64 = vld [vmem:[%s2 + $0x38] sm:$0xff]
    %v65 = vld [vmem:[%s3] sm:$0xff]
    %v66 = vld [vmem:[%s3 + $0x8] sm:$0xff]
    %v67 = vld [vmem:[%s3 + $0x10] sm:$0xff]
    %v68 = vld [vmem:[%s3 + $0x18] sm:$0xff]
    %v69 = vld [vmem:[%s3 + $0x20] sm:$0xff]
    %v70 = vld [vmem:[%s3 + $0x28] sm:$0xff]
    %v71 = vld [vmem:[%s3 + $0x30] sm:$0xff]
    %v72 = vld [vmem:[%s3 + $0x38] sm:$0xff]
    %v73 = vld [vmem:[%s3 + $0x40] sm:$0xff]
    %v74 = vld [vmem:[%s3 + $0x48] sm:$0xff]
    %v75 = vld [vmem:[%s3 + $0x50] sm:$0xff]
    %v76 = vld [vmem:[%s3 + $0x58] sm:$0xff]
    %v77 = vld [vmem:[%s3 + $0x60] sm:$0xff]
    %v78 = vld [vmem:[%s3 + $0x68] sm:$0xff]
    %v79 = vld [vmem:[%s3 + $0x70] sm:$0xff]
    %v80 = vld [vmem:[%s3 + $0x78] sm:$0xff]
    %v81 = vld [vmem:[%s4] sm:$0xff]
    %v82 = vld [vmem:[%s4 + $0x8] sm:$0xff]
    %v83 = vld [vmem:[%s4 + $0x10] sm:$0xff]
    %v84 = vld [vmem:[%s4 + $0x18] sm:$0xff]
    %v85 = vld [vmem:[%s4 + $0x20] sm:$0xff]
    %v86 = vld [vmem:[%s4 + $0x28] sm:$0xff]
    %v87 = vld [vmem:[%s4 + $0x30] sm:$0xff]
    %v88 = vld [vmem:[%s4 + $0x38] sm:$0xff]
    %v89 = vld [vmem:[%s4 + $0x40] sm:$0xff]
    %v90 = vld [vmem:[%s4 + $0x48] sm:$0xff]
    %v91 = vld [vmem:[%s4 + $0x50] sm:$0xff]
    %v92 = vld [vmem:[%s4 + $0x58] sm:$0xff]
    %v93 = vld [vmem:[%s4 + $0x60] sm:$0xff]
    %v94 = vld [vmem:[%s4 + $0x68] sm:$0xff]
    %v95 = vld [vmem:[%s4 + $0x70] sm:$0xff]
    %v96 = vld [vmem:[%s4 + $0x78] sm:$0xff]
    %v97 = vld [vmem:[%s5] sm:$0xff]
    %v98 = vld [vmem:[%s5 + $0x8] sm:$0xff]
    %v99 = vld [vmem:[%s5 + $0x10] sm:$0xff]
    %v100 = vld [vmem:[%s5 + $0x18] sm:$0xff]
    %v101 = vld [vmem:[%s5 + $0x20] sm:$0xff]
    %v102 = vld [vmem:[%s5 + $0x28] sm:$0xff]
    %v103 = vld [vmem:[%s5 + $0x30] sm:$0xff]
    %v104 = vld [vmem:[%s5 + $0x38] sm:$0xff]
    %v105 = vld [vmem:[%s5 + $0x40] sm:$0xff]
    %v106 = vld [vmem:[%s5 + $0x48] sm:$0xff]
    %v107 = vld [vmem:[%s5 + $0x50] sm:$0xff]
    %v108 = vld [vmem:[%s5 + $0x58] sm:$0xff]
    %v109 = vld [vmem:[%s5 + $0x60] sm:$0xff]
    %v110 = vld [vmem:[%s5 + $0x68] sm:$0xff]
    %v111 = vld [vmem:[%s5 + $0x70] sm:$0xff]
    %v112 = vld [vmem:[%s5 + $0x78] sm:$0xff]
    %v113 = vld [vmem:[#allocation6] sm:$0xff]
    %v114 = vld [vmem:[#allocation6 + $0x8] sm:$0xff]
    %v115 = vld [vmem:[#allocation6 + $0x10] sm:$0xff]
    %v116 = vld [vmem:[#allocation6 + $0x18] sm:$0xff]
    %v117 = vld [vmem:[#allocation6 + $0x20] sm:$0xff]
    %v118 = vld [vmem:[#allocation6 + $0x28] sm:$0xff]
    %v119 = vld [vmem:[#allocation6 + $0x30] sm:$0xff]
    %v120 = vld [vmem:[#allocation6 + $0x38] sm:$0xff]
    %v121 = vlaneseq
    %v122 = vand.u32 %v121, 127
    %vm123 = vcmp.lt.s32.totalorder %v122, 0
    %v124 = vsub.s32 0, %v122
    %v125 = vsel %vm123, %v124, %v122
    %v126 = vshrl.u32 %v125, 4
    %v127 = vand.u32 %v125, 15
    %v128 = vsub.s32 0, %v127
    %v129 = vsel %vm123, %v128, %v127
    %vm130 = vcmp.ne.s32.totalorder %v129, 0
    %vm131 = vcmp.lt.s32.totalorder %v129, 0
    %vm132 = vmand %vm131, %vm130
    %v133 = vadd.s32 %v129, 16
    %v134 = vsel %vm132, %v133, %v129
    %vm135 = vcmp.ge.s32.totalorder %v134, 1
    %vm136 = vcmp.lt.s32.totalorder %v134, 15
    %vm137 = vcmp.ge.s32.totalorder %v134, 2
    %vm138 = vcmp.lt.s32.totalorder %v134, 14
    %vm139 = vcmp.ge.s32.totalorder %v134, 4
    %vm140 = vcmp.lt.s32.totalorder %v134, 12
    %vm141 = vcmp.ge.s32.totalorder %v134, 8
    %vm142 = vcmp.lt.s32.totalorder %v134, 8
    %v143 = vld [vmem:[#allocation3] sm:$0xff]
    %v144 = vld [vmem:[#allocation3 + $0x10] sm:$0xff]
    %v145 = vld [vmem:[#allocation3 + $0x20] sm:$0xff]
    %v146 = vld [vmem:[#allocation3 + $0x30] sm:$0xff]
    %vm147 = vcmask 261120
    %v149 = vsel %vm147, %v57, 0
    %v152 = vsel %vm147, %v58, 0
    %v155 = vsel %vm147, %v59, 0
    %v158 = vsel %vm147, %v60, 0
    %v161 = vsel %vm147, %v61, 0
    %v164 = vsel %vm147, %v62, 0
    %v167 = vsel %vm147, %v63, 0
    %v170 = vsel %vm147, %v64, 0
    %172 = vmatprep.subr.mxu0 0.0
    %173 = vmatpush1.msra.mxu0 0.0
    %174 = vmatprep.subr.mxu0 0.0
    %175 = vmatpush1.msra.mxu0 0.0
    %176 = vmatprep.subr.mxu0 0.0
    %177 = vmatpush1.msra.mxu0 0.0
    %178 = vmatprep.subr.mxu0 0.0
    %179 = vmatpush1.msra.mxu0 0.0
    %180 = vmatprep.subr.mxu0 0.0
    %181 = vmatpush1.msra.mxu0 0.0
    %182 = vmatprep.subr.mxu0 0.0
    %183 = vmatpush1.msra.mxu0 0.0
    %184 = vmatprep.subr.mxu0 0.0
    %185 = vmatpush1.msra.mxu0 0.0
    %186 = vmatprep.subr.mxu0 0.0
    %187 = vmatpush1.msra.mxu0 0.0
    %188 = vmatprep.subr.mxu0 0.0
    %189 = vmatpush1.msra.mxu0 0.0
    %190 = vmatprep.subr.mxu0 0.0
    %191 = vmatpush1.msra.mxu0 0.0
    %192 = vmatprep.subr.mxu0 0.0
    %193 = vmatpush1.msra.mxu0 0.0
    %194 = vmatprep.subr.mxu0 0.0
    %195 = vmatpush1.msra.mxu0 0.0
    %196 = vmatprep.subr.mxu0 0.0
    %197 = vmatpush1.msra.mxu0 %v146
    %198 = vmatprep.subr.mxu0 0.0
    %199 = vmatpush1.msra.mxu0 %v145
    %200 = vmatprep.subr.mxu0 0.0
    %201 = vmatpush1.msra.mxu0 %v144
    %202 = vmatprep.subr.mxu0 0.0
    %203 = vmatpush1.msra.mxu0 %v143
    %204 = vmatprep.subr.mxu0 0.0
    %205 = vmatpush2.msra.mxu0 0.0
    %206 = vmatprep.subr.mxu0 0.0
    %207 = vmatpush2.msra.mxu0 0.0
    %208 = vmatprep.subr.mxu0 0.0
    %209 = vmatpush2.msra.mxu0 0.0
    %210 = vmatprep.subr.mxu0 0.0
    %211 = vmatpush2.msra.mxu0 0.0
    %212 = vmatprep.subr.mxu0 0.0
    %213 = vmatpush2.msra.mxu0 0.0
    %214 = vmatprep.subr.mxu0 0.0
    %215 = vmatpush2.msra.mxu0 0.0
    %216 = vmatprep.subr.mxu0 0.0
    %217 = vmatpush2.msra.mxu0 0.0
    %218 = vmatprep.subr.mxu0 0.0
    %219 = vmatpush2.msra.mxu0 0.0
    %220 = vmatprep.subr.mxu0 0.0
    %221 = vmatpush2.msra.mxu0 0.0
    %222 = vmatprep.subr.mxu0 0.0
    %223 = vmatpush2.msra.mxu0 0.0
    %224 = vmatprep.subr.mxu0 0.0
    %225 = vmatpush2.msra.mxu0 0.0
    %226 = vmatprep.subr.mxu0 0.0
    %227 = vmatpush2.msra.mxu0 0.0
    %228 = vmatprep.subr.mxu0 0.0
    %229 = vmatpush2.msra.mxu0 0.0
    %230 = vmatprep.subr.mxu0 0.0
    %231 = vmatpush2.msra.mxu0 0.0
    %232 = vmatprep.subr.mxu0 0.0
    %233 = vmatpush2.msra.mxu0 0.0
    %234 = vmatprep.subr.mxu0 0.0
    %235 = vmatpush2.msra.mxu0 0.0
    %236 = vmatprep.mubr.f32.mxu0 0.0
    %237 = vmatmul.mubr.f32.gmra.mxu0 %v149
    %v238 = vpop.f32.mrf.mxu0
    %v239 = vadd.f32 0.0, %v238
    %v240 = vpop.f32.mrf.mxu0
    %241 = vmatprep.mubr.f32.mxu0 0.0
    %242 = vmatmul.mubr.f32.gmra.mxu0 %v152
    %v243 = vpop.f32.mrf.mxu0
    %v244 = vadd.f32 0.0, %v243
    %v245 = vpop.f32.mrf.mxu0
    %246 = vmatprep.mubr.f32.mxu0 0.0
    %247 = vmatmul.mubr.f32.gmra.mxu0 %v155
    %v248 = vpop.f32.mrf.mxu0
    %v249 = vadd.f32 0.0, %v248
    %v250 = vpop.f32.mrf.mxu0
    %251 = vmatprep.mubr.f32.mxu0 0.0
    %252 = vmatmul.mubr.f32.gmra.mxu0 %v158
    %v253 = vpop.f32.mrf.mxu0
    %v254 = vadd.f32 0.0, %v253
    %v255 = vpop.f32.mrf.mxu0
    %256 = vmatprep.mubr.f32.mxu0 0.0
    %257 = vmatmul.mubr.f32.gmra.mxu0 %v161
    %v258 = vpop.f32.mrf.mxu0
    %v259 = vadd.f32 0.0, %v258
    %v260 = vpop.f32.mrf.mxu0
    %261 = vmatprep.mubr.f32.mxu0 0.0
    %262 = vmatmul.mubr.f32.gmra.mxu0 %v164
    %v263 = vpop.f32.mrf.mxu0
    %v264 = vadd.f32 0.0, %v263
    %v265 = vpop.f32.mrf.mxu0
    %266 = vmatprep.mubr.f32.mxu0 0.0
    %267 = vmatmul.mubr.f32.gmra.mxu0 %v167
    %v268 = vpop.f32.mrf.mxu0
    %v269 = vadd.f32 0.0, %v268
    %v270 = vpop.f32.mrf.mxu0
    %271 = vmatprep.mubr.f32.mxu0 0.0
    %272 = vmatmul.mubr.f32.gmra.mxu0 %v170
    %v273 = vpop.f32.mrf.mxu0
    %v274 = vadd.f32 0.0, %v273
    %v275 = vpop.f32.mrf.mxu0
    %276 = vdwg.mxu0
    %277 = vmatprep.subr.mxu0 0.0
    %278 = vmatpush1.msra.mxu0 %v80
    %279 = vmatprep.subr.mxu0 0.0
    %280 = vmatpush1.msra.mxu0 %v79
    %281 = vmatprep.subr.mxu0 0.0
    %282 = vmatpush1.msra.mxu0 %v78
    %283 = vmatprep.subr.mxu0 0.0
    %284 = vmatpush1.msra.mxu0 %v77
    %285 = vmatprep.subr.mxu0 0.0
    %286 = vmatpush1.msra.mxu0 %v76
    %287 = vmatprep.subr.mxu0 0.0
    %288 = vmatpush1.msra.mxu0 %v75
    %289 = vmatprep.subr.mxu0 0.0
    %290 = vmatpush1.msra.mxu0 %v74
    %291 = vmatprep.subr.mxu0 0.0
    %292 = vmatpush1.msra.mxu0 %v73
    %293 = vmatprep.subr.mxu0 0.0
    %294 = vmatpush1.msra.mxu0 %v72
    %295 = vmatprep.subr.mxu0 0.0
    %296 = vmatpush1.msra.mxu0 %v71
    %297 = vmatprep.subr.mxu0 0.0
    %298 = vmatpush1.msra.mxu0 %v70
    %299 = vmatprep.subr.mxu0 0.0
    %300 = vmatpush1.msra.mxu0 %v69
    %301 = vmatprep.subr.mxu0 0.0
    %302 = vmatpush1.msra.mxu0 %v68
    %303 = vmatprep.subr.mxu0 0.0
    %304 = vmatpush1.msra.mxu0 %v67
    %305 = vmatprep.subr.mxu0 0.0
    %306 = vmatpush1.msra.mxu0 %v66
    %307 = vmatprep.subr.mxu0 0.0
    %308 = vmatpush1.msra.mxu0 %v65
    %309 = vmatprep.subr.mxu0 0.0
    %310 = vmatpush2.msra.mxu0 0.0
    %311 = vmatprep.subr.mxu0 0.0
    %312 = vmatpush2.msra.mxu0 0.0
    %313 = vmatprep.subr.mxu0 0.0
    %314 = vmatpush2.msra.mxu0 0.0
    %315 = vmatprep.subr.mxu0 0.0
    %316 = vmatpush2.msra.mxu0 0.0
    %317 = vmatprep.subr.mxu0 0.0
    %318 = vmatpush2.msra.mxu0 0.0
    %319 = vmatprep.subr.mxu0 0.0
    %320 = vmatpush2.msra.mxu0 0.0
    %321 = vmatprep.subr.mxu0 0.0
    %322 = vmatpush2.msra.mxu0 0.0
    %323 = vmatprep.subr.mxu0 0.0
    %324 = vmatpush2.msra.mxu0 0.0
    %325 = vmatprep.subr.mxu0 0.0
    %326 = vmatpush2.msra.mxu0 0.0
    %327 = vmatprep.subr.mxu0 0.0
    %328 = vmatpush2.msra.mxu0 0.0
    %329 = vmatprep.subr.mxu0 0.0
    %330 = vmatpush2.msra.mxu0 0.0
    %331 = vmatprep.subr.mxu0 0.0
    %332 = vmatpush2.msra.mxu0 0.0
    %333 = vmatprep.subr.mxu0 0.0
    %334 = vmatpush2.msra.mxu0 0.0
    %335 = vmatprep.subr.mxu0 0.0
    %336 = vmatpush2.msra.mxu0 0.0
    %337 = vmatprep.subr.mxu0 0.0
    %338 = vmatpush2.msra.mxu0 0.0
    %339 = vmatprep.subr.mxu0 0.0
    %340 = vmatpush2.msra.mxu0 0.0
    %341 = vmatprep.mubr.f32.mxu0 0.0
    %342 = vmatmul.mubr.f32.gmra.mxu0 %v239
    %v343 = vpop.f32.mrf.mxu0
    %v344 = vadd.f32 0.0, %v343
    %v345 = vpop.f32.mrf.mxu0
    %346 = vmatprep.mubr.f32.mxu0 0.0
    %347 = vmatmul.mubr.f32.gmra.mxu0 %v244
    %v348 = vpop.f32.mrf.mxu0
    %v349 = vadd.f32 0.0, %v348
    %v350 = vpop.f32.mrf.mxu0
    %351 = vmatprep.mubr.f32.mxu0 0.0
    %352 = vmatmul.mubr.f32.gmra.mxu0 %v249
    %v353 = vpop.f32.mrf.mxu0
    %v354 = vadd.f32 0.0, %v353
    %v355 = vpop.f32.mrf.mxu0
    %356 = vmatprep.mubr.f32.mxu0 0.0
    %357 = vmatmul.mubr.f32.gmra.mxu0 %v254
    %v358 = vpop.f32.mrf.mxu0
    %v359 = vadd.f32 0.0, %v358
    %v360 = vpop.f32.mrf.mxu0
    %361 = vmatprep.mubr.f32.mxu0 0.0
    %362 = vmatmul.mubr.f32.gmra.mxu0 %v259
    %v363 = vpop.f32.mrf.mxu0
    %v364 = vadd.f32 0.0, %v363
    %v365 = vpop.f32.mrf.mxu0
    %366 = vmatprep.mubr.f32.mxu0 0.0
    %367 = vmatmul.mubr.f32.gmra.mxu0 %v264
    %v368 = vpop.f32.mrf.mxu0
    %v369 = vadd.f32 0.0, %v368
    %v370 = vpop.f32.mrf.mxu0
    %371 = vmatprep.mubr.f32.mxu0 0.0
    %372 = vmatmul.mubr.f32.gmra.mxu0 %v269
    %v373 = vpop.f32.mrf.mxu0
    %v374 = vadd.f32 0.0, %v373
    %v375 = vpop.f32.mrf.mxu0
    %376 = vmatprep.mubr.f32.mxu0 0.0
    %377 = vmatmul.mubr.f32.gmra.mxu0 %v274
    %v378 = vpop.f32.mrf.mxu0
    %v379 = vadd.f32 0.0, %v378
    %v380 = vpop.f32.mrf.mxu0
    %381 = vdwg.mxu0
    %382 = vrot.lane.b32.xlu0 %v344, 1
    %v383 = vpop.permute.xlu0 %382
    %384 = vrot.lane.b32.xlu0 %v349, 1
    %v385 = vpop.permute.xlu0 %384
    %386 = vrot.lane.b32.xlu0 %v354, 1
    %v387 = vpop.permute.xlu0 %386
    %388 = vrot.lane.b32.xlu0 %v359, 1
    %v389 = vpop.permute.xlu0 %388
    %390 = vrot.lane.b32.xlu0 %v364, 1
    %v391 = vpop.permute.xlu0 %390
    %392 = vrot.lane.b32.xlu0 %v369, 1
    %v393 = vpop.permute.xlu0 %392
    %394 = vrot.lane.b32.xlu0 %v374, 1
    %v395 = vpop.permute.xlu0 %394
    %396 = vrot.lane.b32.xlu0 %v379, 1
    %v397 = vpop.permute.xlu0 %396
    %398 = vrot.lane.b32.xlu0 %v344, 127
    %v399 = vpop.permute.xlu0 %398
    %400 = vrot.lane.b32.xlu0 %v349, 127
    %v401 = vpop.permute.xlu0 %400
    %402 = vrot.lane.b32.xlu0 %v354, 127
    %v403 = vpop.permute.xlu0 %402
    %404 = vrot.lane.b32.xlu0 %v359, 127
    %v405 = vpop.permute.xlu0 %404
    %406 = vrot.lane.b32.xlu0 %v364, 127
    %v407 = vpop.permute.xlu0 %406
    %408 = vrot.lane.b32.xlu0 %v369, 127
    %v409 = vpop.permute.xlu0 %408
    %410 = vrot.lane.b32.xlu0 %v374, 127
    %v411 = vpop.permute.xlu0 %410
    %412 = vrot.lane.b32.xlu0 %v379, 127
    %v413 = vpop.permute.xlu0 %412
    %v414 = vsel %vm135, %v383, %v344
    %v415 = vsel %vm135, %v385, %v349
    %v416 = vsel %vm135, %v387, %v354
    %v417 = vsel %vm135, %v389, %v359
    %v418 = vsel %vm135, %v391, %v364
    %v419 = vsel %vm135, %v393, %v369
    %v420 = vsel %vm135, %v395, %v374
    %v421 = vsel %vm135, %v397, %v379
    %v422 = vmax.f32 %v344, %v414
    %v423 = vmax.f32 %v349, %v415
    %v424 = vmax.f32 %v354, %v416
    %v425 = vmax.f32 %v359, %v417
    %v426 = vmax.f32 %v364, %v418
    %v427 = vmax.f32 %v369, %v419
    %v428 = vmax.f32 %v374, %v420
    %v429 = vmax.f32 %v379, %v421
    %v430 = vsel %vm136, %v399, %v422
    %v431 = vsel %vm136, %v401, %v423
    %v432 = vsel %vm136, %v403, %v424
    %v433 = vsel %vm136, %v405, %v425
    %v434 = vsel %vm136, %v407, %v426
    %v435 = vsel %vm136, %v409, %v427
    %v436 = vsel %vm136, %v411, %v428
    %v437 = vsel %vm136, %v413, %v429
    %v438 = vmax.f32 %v422, %v430
    %v439 = vmax.f32 %v423, %v431
    %v440 = vmax.f32 %v424, %v432
    %v441 = vmax.f32 %v425, %v433
    %v442 = vmax.f32 %v426, %v434
    %v443 = vmax.f32 %v427, %v435
    %v444 = vmax.f32 %v428, %v436
    %v445 = vmax.f32 %v429, %v437
    %446 = vrot.lane.b32.xlu0 %v438, 2
    %v447 = vpop.permute.xlu0 %446
    %448 = vrot.lane.b32.xlu0 %v439, 2
    %v449 = vpop.permute.xlu0 %448
    %450 = vrot.lane.b32.xlu0 %v440, 2
    %v451 = vpop.permute.xlu0 %450
    %452 = vrot.lane.b32.xlu0 %v441, 2
    %v453 = vpop.permute.xlu0 %452
    %454 = vrot.lane.b32.xlu0 %v442, 2
    %v455 = vpop.permute.xlu0 %454
    %456 = vrot.lane.b32.xlu0 %v443, 2
    %v457 = vpop.permute.xlu0 %456
    %458 = vrot.lane.b32.xlu0 %v444, 2
    %v459 = vpop.permute.xlu0 %458
    %460 = vrot.lane.b32.xlu0 %v445, 2
    %v461 = vpop.permute.xlu0 %460
    %462 = vrot.lane.b32.xlu0 %v438, 126
    %v463 = vpop.permute.xlu0 %462
    %464 = vrot.lane.b32.xlu0 %v439, 126
    %v465 = vpop.permute.xlu0 %464
    %466 = vrot.lane.b32.xlu0 %v440, 126
    %v467 = vpop.permute.xlu0 %466
    %468 = vrot.lane.b32.xlu0 %v441, 126
    %v469 = vpop.permute.xlu0 %468
    %470 = vrot.lane.b32.xlu0 %v442, 126
    %v471 = vpop.permute.xlu0 %470
    %472 = vrot.lane.b32.xlu0 %v443, 126
    %v473 = vpop.permute.xlu0 %472
    %474 = vrot.lane.b32.xlu0 %v444, 126
    %v475 = vpop.permute.xlu0 %474
    %476 = vrot.lane.b32.xlu0 %v445, 126
    %v477 = vpop.permute.xlu0 %476
    %v478 = vsel %vm137, %v447, %v438
    %v479 = vsel %vm137, %v449, %v439
    %v480 = vsel %vm137, %v451, %v440
    %v481 = vsel %vm137, %v453, %v441
    %v482 = vsel %vm137, %v455, %v442
    %v483 = vsel %vm137, %v457, %v443
    %v484 = vsel %vm137, %v459, %v444
    %v485 = vsel %vm137, %v461, %v445
    %v486 = vmax.f32 %v438, %v478
    %v487 = vmax.f32 %v439, %v479
    %v488 = vmax.f32 %v440, %v480
    %v489 = vmax.f32 %v441, %v481
    %v490 = vmax.f32 %v442, %v482
    %v491 = vmax.f32 %v443, %v483
    %v492 = vmax.f32 %v444, %v484
    %v493 = vmax.f32 %v445, %v485
    %v494 = vsel %vm138, %v463, %v486
    %v495 = vsel %vm138, %v465, %v487
    %v496 = vsel %vm138, %v467, %v488
    %v497 = vsel %vm138, %v469, %v489
    %v498 = vsel %vm138, %v471, %v490
    %v499 = vsel %vm138, %v473, %v491
    %v500 = vsel %vm138, %v475, %v492
    %v501 = vsel %vm138, %v477, %v493
    %v502 = vmax.f32 %v486, %v494
    %v503 = vmax.f32 %v487, %v495
    %v504 = vmax.f32 %v488, %v496
    %v505 = vmax.f32 %v489, %v497
    %v506 = vmax.f32 %v490, %v498
    %v507 = vmax.f32 %v491, %v499
    %v508 = vmax.f32 %v492, %v500
    %v509 = vmax.f32 %v493, %v501
    %510 = vrot.lane.b32.xlu0 %v502, 4
    %v511 = vpop.permute.xlu0 %510
    %512 = vrot.lane.b32.xlu0 %v503, 4
    %v513 = vpop.permute.xlu0 %512
    %514 = vrot.lane.b32.xlu0 %v504, 4
    %v515 = vpop.permute.xlu0 %514
    %516 = vrot.lane.b32.xlu0 %v505, 4
    %v517 = vpop.permute.xlu0 %516
    %518 = vrot.lane.b32.xlu0 %v506, 4
    %v519 = vpop.permute.xlu0 %518
    %520 = vrot.lane.b32.xlu0 %v507, 4
    %v521 = vpop.permute.xlu0 %520
    %522 = vrot.lane.b32.xlu0 %v508, 4
    %v523 = vpop.permute.xlu0 %522
    %524 = vrot.lane.b32.xlu0 %v509, 4
    %v525 = vpop.permute.xlu0 %524
    %526 = vrot.lane.b32.xlu0 %v502, 124
    %v527 = vpop.permute.xlu0 %526
    %528 = vrot.lane.b32.xlu0 %v503, 124
    %v529 = vpop.permute.xlu0 %528
    %530 = vrot.lane.b32.xlu0 %v504, 124
    %v531 = vpop.permute.xlu0 %530
    %532 = vrot.lane.b32.xlu0 %v505, 124
    %v533 = vpop.permute.xlu0 %532
    %534 = vrot.lane.b32.xlu0 %v506, 124
    %v535 = vpop.permute.xlu0 %534
    %536 = vrot.lane.b32.xlu0 %v507, 124
    %v537 = vpop.permute.xlu0 %536
    %538 = vrot.lane.b32.xlu0 %v508, 124
    %v539 = vpop.permute.xlu0 %538
    %540 = vrot.lane.b32.xlu0 %v509, 124
    %v541 = vpop.permute.xlu0 %540
    %v542 = vsel %vm139, %v511, %v502
    %v543 = vsel %vm139, %v513, %v503
    %v544 = vsel %vm139, %v515, %v504
    %v545 = vsel %vm139, %v517, %v505
    %v546 = vsel %vm139, %v519, %v506
    %v547 = vsel %vm139, %v521, %v507
    %v548 = vsel %vm139, %v523, %v508
    %v549 = vsel %vm139, %v525, %v509
    %v550 = vmax.f32 %v502, %v542
    %v551 = vmax.f32 %v503, %v543
    %v552 = vmax.f32 %v504, %v544
    %v553 = vmax.f32 %v505, %v545
    %v554 = vmax.f32 %v506, %v546
    %v555 = vmax.f32 %v507, %v547
    %v556 = vmax.f32 %v508, %v548
    %v557 = vmax.f32 %v509, %v549
    %v558 = vsel %vm140, %v527, %v550
    %v559 = vsel %vm140, %v529, %v551
    %v560 = vsel %vm140, %v531, %v552
    %v561 = vsel %vm140, %v533, %v553
    %v562 = vsel %vm140, %v535, %v554
    %v563 = vsel %vm140, %v537, %v555
    %v564 = vsel %vm140, %v539, %v556
    %v565 = vsel %vm140, %v541, %v557
    %v566 = vmax.f32 %v550, %v558
    %v567 = vmax.f32 %v551, %v559
    %v568 = vmax.f32 %v552, %v560
    %v569 = vmax.f32 %v553, %v561
    %v570 = vmax.f32 %v554, %v562
    %v571 = vmax.f32 %v555, %v563
    %v572 = vmax.f32 %v556, %v564
    %v573 = vmax.f32 %v557, %v565
    %574 = vrot.lane.b32.xlu0 %v566, 8
    %v575 = vpop.permute.xlu0 %574
    %576 = vrot.lane.b32.xlu0 %v567, 8
    %v577 = vpop.permute.xlu0 %576
    %578 = vrot.lane.b32.xlu0 %v568, 8
    %v579 = vpop.permute.xlu0 %578
    %580 = vrot.lane.b32.xlu0 %v569, 8
    %v581 = vpop.permute.xlu0 %580
    %582 = vrot.lane.b32.xlu0 %v570, 8
    %v583 = vpop.permute.xlu0 %582
    %584 = vrot.lane.b32.xlu0 %v571, 8
    %v585 = vpop.permute.xlu0 %584
    %586 = vrot.lane.b32.xlu0 %v572, 8
    %v587 = vpop.permute.xlu0 %586
    %588 = vrot.lane.b32.xlu0 %v573, 8
    %v589 = vpop.permute.xlu0 %588
    %590 = vrot.lane.b32.xlu0 %v566, 120
    %v591 = vpop.permute.xlu0 %590
    %592 = vrot.lane.b32.xlu0 %v567, 120
    %v593 = vpop.permute.xlu0 %592
    %594 = vrot.lane.b32.xlu0 %v568, 120
    %v595 = vpop.permute.xlu0 %594
    %596 = vrot.lane.b32.xlu0 %v569, 120
    %v597 = vpop.permute.xlu0 %596
    %598 = vrot.lane.b32.xlu0 %v570, 120
    %v599 = vpop.permute.xlu0 %598
    %600 = vrot.lane.b32.xlu0 %v571, 120
    %v601 = vpop.permute.xlu0 %600
    %602 = vrot.lane.b32.xlu0 %v572, 120
    %v603 = vpop.permute.xlu0 %602
    %604 = vrot.lane.b32.xlu0 %v573, 120
    %v605 = vpop.permute.xlu0 %604
    %v606 = vsel %vm141, %v575, %v566
    %v607 = vsel %vm141, %v577, %v567
    %v608 = vsel %vm141, %v579, %v568
    %v609 = vsel %vm141, %v581, %v569
    %v610 = vsel %vm141, %v583, %v570
    %v611 = vsel %vm141, %v585, %v571
    %v612 = vsel %vm141, %v587, %v572
    %v613 = vsel %vm141, %v589, %v573
    %v614 = vmax.f32 %v566, %v606
    %v615 = vmax.f32 %v567, %v607
    %v616 = vmax.f32 %v568, %v608
    %v617 = vmax.f32 %v569, %v609
    %v618 = vmax.f32 %v570, %v610
    %v619 = vmax.f32 %v571, %v611
    %v620 = vmax.f32 %v572, %v612
    %v621 = vmax.f32 %v573, %v613
    %v622 = vsel %vm142, %v591, %v614
    %v623 = vsel %vm142, %v593, %v615
    %v624 = vsel %vm142, %v595, %v616
    %v625 = vsel %vm142, %v597, %v617
    %v626 = vsel %vm142, %v599, %v618
    %v627 = vsel %vm142, %v601, %v619
    %v628 = vsel %vm142, %v603, %v620
    %v629 = vsel %vm142, %v605, %v621
    %v630 = vmax.f32 %v614, %v622
    %v631 = vmax.f32 %v615, %v623
    %v632 = vmax.f32 %v616, %v624
    %v633 = vmax.f32 %v617, %v625
    %v634 = vmax.f32 %v618, %v626
    %v635 = vmax.f32 %v619, %v627
    %v636 = vmax.f32 %v620, %v628
    %v637 = vmax.f32 %v621, %v629
    %v638 = vsub.f32 %v344, %v630
    %v639 = vsub.f32 %v349, %v631
    %v640 = vsub.f32 %v354, %v632
    %v641 = vsub.f32 %v359, %v633
    %v642 = vsub.f32 %v364, %v634
    %v643 = vsub.f32 %v369, %v635
    %v644 = vsub.f32 %v374, %v636
    %v645 = vsub.f32 %v379, %v637
    %v646 = vmul.f32 %v638, 1.442695
    %v647 = vpow.pop %v646
    %v648 = vmul.f32 %v639, 1.442695
    %v649 = vpow.pop %v648
    %v650 = vmul.f32 %v640, 1.442695
    %v651 = vpow.pop %v650
    %v652 = vmul.f32 %v641, 1.442695
    %v653 = vpow.pop %v652
    %v654 = vmul.f32 %v642, 1.442695
    %v655 = vpow.pop %v654
    %v656 = vmul.f32 %v643, 1.442695
    %v657 = vpow.pop %v656
    %v658 = vmul.f32 %v644, 1.442695
    %v659 = vpow.pop %v658
    %v660 = vmul.f32 %v645, 1.442695
    %v661 = vpow.pop %v660
    %662 = vmatprep.subr.mxu0 0.0
    %663 = vmatpush1.msra.mxu0 %v96
    %664 = vmatprep.subr.mxu0 0.0
    %665 = vmatpush1.msra.mxu0 %v95
    %666 = vmatprep.subr.mxu0 0.0
    %667 = vmatpush1.msra.mxu0 %v94
    %668 = vmatprep.subr.mxu0 0.0
    %669 = vmatpush1.msra.mxu0 %v93
    %670 = vmatprep.subr.mxu0 0.0
    %671 = vmatpush1.msra.mxu0 %v92
    %672 = vmatprep.subr.mxu0 0.0
    %673 = vmatpush1.msra.mxu0 %v91
    %674 = vmatprep.subr.mxu0 0.0
    %675 = vmatpush1.msra.mxu0 %v90
    %676 = vmatprep.subr.mxu0 0.0
    %677 = vmatpush1.msra.mxu0 %v89
    %678 = vmatprep.subr.mxu0 0.0
    %679 = vmatpush1.msra.mxu0 %v88
    %680 = vmatprep.subr.mxu0 0.0
    %681 = vmatpush1.msra.mxu0 %v87
    %682 = vmatprep.subr.mxu0 0.0
    %683 = vmatpush1.msra.mxu0 %v86
    %684 = vmatprep.subr.mxu0 0.0
    %685 = vmatpush1.msra.mxu0 %v85
    %686 = vmatprep.subr.mxu0 0.0
    %687 = vmatpush1.msra.mxu0 %v84
    %688 = vmatprep.subr.mxu0 0.0
    %689 = vmatpush1.msra.mxu0 %v83
    %690 = vmatprep.subr.mxu0 0.0
    %691 = vmatpush1.msra.mxu0 %v82
    %692 = vmatprep.subr.mxu0 0.0
    %693 = vmatpush1.msra.mxu0 %v81
    %694 = vmatprep.subr.mxu0 0.0
    %695 = vmatpush2.msra.mxu0 0.0
    %696 = vmatprep.subr.mxu0 0.0
    %697 = vmatpush2.msra.mxu0 0.0
    %698 = vmatprep.subr.mxu0 0.0
    %699 = vmatpush2.msra.mxu0 0.0
    %700 = vmatprep.subr.mxu0 0.0
    %701 = vmatpush2.msra.mxu0 0.0
    %702 = vmatprep.subr.mxu0 0.0
    %703 = vmatpush2.msra.mxu0 0.0
    %704 = vmatprep.subr.mxu0 0.0
    %705 = vmatpush2.msra.mxu0 0.0
    %706 = vmatprep.subr.mxu0 0.0
    %707 = vmatpush2.msra.mxu0 0.0
    %708 = vmatprep.subr.mxu0 0.0
    %709 = vmatpush2.msra.mxu0 0.0
    %710 = vmatprep.subr.mxu0 0.0
    %711 = vmatpush2.msra.mxu0 0.0
    %712 = vmatprep.subr.mxu0 0.0
    %713 = vmatpush2.msra.mxu0 0.0
    %714 = vmatprep.subr.mxu0 0.0
    %715 = vmatpush2.msra.mxu0 0.0
    %716 = vmatprep.subr.mxu0 0.0
    %717 = vmatpush2.msra.mxu0 0.0
    %718 = vmatprep.subr.mxu0 0.0
    %719 = vmatpush2.msra.mxu0 0.0
    %720 = vmatprep.subr.mxu0 0.0
    %721 = vmatpush2.msra.mxu0 0.0
    %722 = vmatprep.subr.mxu0 0.0
    %723 = vmatpush2.msra.mxu0 0.0
    %724 = vmatprep.subr.mxu0 0.0
    %725 = vmatpush2.msra.mxu0 0.0
    %726 = vmatprep.mubr.f32.mxu0 0.0
    %727 = vmatmul.mubr.f32.gmra.mxu0 %v647
    %v728 = vpop.f32.mrf.mxu0
    %v729 = vadd.f32 0.0, %v728
    %v730 = vpop.f32.mrf.mxu0
    %731 = vmatprep.mubr.f32.mxu0 0.0
    %732 = vmatmul.mubr.f32.gmra.mxu0 %v649
    %v733 = vpop.f32.mrf.mxu0
    %v734 = vadd.f32 0.0, %v733
    %v735 = vpop.f32.mrf.mxu0
    %736 = vmatprep.mubr.f32.mxu0 0.0
    %737 = vmatmul.mubr.f32.gmra.mxu0 %v651
    %v738 = vpop.f32.mrf.mxu0
    %v739 = vadd.f32 0.0, %v738
    %v740 = vpop.f32.mrf.mxu0
    %741 = vmatprep.mubr.f32.mxu0 0.0
    %742 = vmatmul.mubr.f32.gmra.mxu0 %v653
    %v743 = vpop.f32.mrf.mxu0
    %v744 = vadd.f32 0.0, %v743
    %v745 = vpop.f32.mrf.mxu0
    %746 = vmatprep.mubr.f32.mxu0 0.0
    %747 = vmatmul.mubr.f32.gmra.mxu0 %v655
    %v748 = vpop.f32.mrf.mxu0
    %v749 = vadd.f32 0.0, %v748
    %v750 = vpop.f32.mrf.mxu0
    %751 = vmatprep.mubr.f32.mxu0 0.0
    %752 = vmatmul.mubr.f32.gmra.mxu0 %v657
    %v753 = vpop.f32.mrf.mxu0
    %v754 = vadd.f32 0.0, %v753
    %v755 = vpop.f32.mrf.mxu0
    %756 = vmatprep.mubr.f32.mxu0 0.0
    %757 = vmatmul.mubr.f32.gmra.mxu0 %v659
    %v758 = vpop.f32.mrf.mxu0
    %v759 = vadd.f32 0.0, %v758
    %v760 = vpop.f32.mrf.mxu0
    %761 = vmatprep.mubr.f32.mxu0 0.0
    %762 = vmatmul.mubr.f32.gmra.mxu0 %v661
    %v763 = vpop.f32.mrf.mxu0
    %v764 = vadd.f32 0.0, %v763
    %v765 = vpop.f32.mrf.mxu0
    %766 = vdwg.mxu0
    %v767 = vrcp.pop %v729
    %v768 = vmul.f32 %v647, %v767
    %v769 = vrcp.pop %v734
    %v770 = vmul.f32 %v649, %v769
    %v771 = vrcp.pop %v739
    %v772 = vmul.f32 %v651, %v771
    %v773 = vrcp.pop %v744
    %v774 = vmul.f32 %v653, %v773
    %v775 = vrcp.pop %v749
    %v776 = vmul.f32 %v655, %v775
    %v777 = vrcp.pop %v754
    %v778 = vmul.f32 %v657, %v777
    %v779 = vrcp.pop %v759
    %v780 = vmul.f32 %v659, %v779
    %v781 = vrcp.pop %v764
    %v782 = vmul.f32 %v661, %v781
    %s783 = ssub.f32 1.0, %s56
    %v784 = vstv %s783
    %v785 = vmul.f32 %v784, %v768
    %v786 = vmul.f32 %v784, %v770
    %v787 = vmul.f32 %v784, %v772
    %v788 = vmul.f32 %v784, %v774
    %v789 = vmul.f32 %v784, %v776
    %v790 = vmul.f32 %v784, %v778
    %v791 = vmul.f32 %v784, %v780
    %v792 = vmul.f32 %v784, %v782
    %v793 = vstv %s56
    %v794 = vadd.f32 %v793, %v785
    %v795 = vadd.f32 %v793, %v786
    %v796 = vadd.f32 %v793, %v787
    %v797 = vadd.f32 %v793, %v788
    %v798 = vadd.f32 %v793, %v789
    %v799 = vadd.f32 %v793, %v790
    %v800 = vadd.f32 %v793, %v791
    %v801 = vadd.f32 %v793, %v792
    %v802 = vmul.f32 %v239, %v794
    %v803 = vmul.f32 %v244, %v795
    %v804 = vmul.f32 %v249, %v796
    %v805 = vmul.f32 %v254, %v797
    %v806 = vmul.f32 %v259, %v798
    %v807 = vmul.f32 %v264, %v799
    %v808 = vmul.f32 %v269, %v800
    %v809 = vmul.f32 %v274, %v801
    %810 = vmatprep.subr.mxu0 0.0
    %811 = vmatpush1.msra.mxu0 %v112
    %812 = vmatprep.subr.mxu0 0.0
    %813 = vmatpush1.msra.mxu0 %v111
    %814 = vmatprep.subr.mxu0 0.0
    %815 = vmatpush1.msra.mxu0 %v110
    %816 = vmatprep.subr.mxu0 0.0
    %817 = vmatpush1.msra.mxu0 %v109
    %818 = vmatprep.subr.mxu0 0.0
    %819 = vmatpush1.msra.mxu0 %v108
    %820 = vmatprep.subr.mxu0 0.0
    %821 = vmatpush1.msra.mxu0 %v107
    %822 = vmatprep.subr.mxu0 0.0
    %823 = vmatpush1.msra.mxu0 %v106
    %824 = vmatprep.subr.mxu0 0.0
    %825 = vmatpush1.msra.mxu0 %v105
    %826 = vmatprep.subr.mxu0 0.0
    %827 = vmatpush1.msra.mxu0 %v104
    %828 = vmatprep.subr.mxu0 0.0
    %829 = vmatpush1.msra.mxu0 %v103
    %830 = vmatprep.subr.mxu0 0.0
    %831 = vmatpush1.msra.mxu0 %v102
    %832 = vmatprep.subr.mxu0 0.0
    %833 = vmatpush1.msra.mxu0 %v101
    %834 = vmatprep.subr.mxu0 0.0
    %835 = vmatpush1.msra.mxu0 %v100
    %836 = vmatprep.subr.mxu0 0.0
    %837 = vmatpush1.msra.mxu0 %v99
    %838 = vmatprep.subr.mxu0 0.0
    %839 = vmatpush1.msra.mxu0 %v98
    %840 = vmatprep.subr.mxu0 0.0
    %841 = vmatpush1.msra.mxu0 %v97
    %842 = vmatprep.subr.mxu0 0.0
    %843 = vmatpush2.msra.mxu0 0.0
    %844 = vmatprep.subr.mxu0 0.0
    %845 = vmatpush2.msra.mxu0 0.0
    %846 = vmatprep.subr.mxu0 0.0
    %847 = vmatpush2.msra.mxu0 0.0
    %848 = vmatprep.subr.mxu0 0.0
    %849 = vmatpush2.msra.mxu0 0.0
    %850 = vmatprep.subr.mxu0 0.0
    %851 = vmatpush2.msra.mxu0 0.0
    %852 = vmatprep.subr.mxu0 0.0
    %853 = vmatpush2.msra.mxu0 0.0
    %854 = vmatprep.subr.mxu0 0.0
    %855 = vmatpush2.msra.mxu0 0.0
    %856 = vmatprep.subr.mxu0 0.0
    %857 = vmatpush2.msra.mxu0 0.0
    %858 = vmatprep.subr.mxu0 0.0
    %859 = vmatpush2.msra.mxu0 0.0
    %860 = vmatprep.subr.mxu0 0.0
    %861 = vmatpush2.msra.mxu0 0.0
    %862 = vmatprep.subr.mxu0 0.0
    %863 = vmatpush2.msra.mxu0 0.0
    %864 = vmatprep.subr.mxu0 0.0
    %865 = vmatpush2.msra.mxu0 0.0
    %866 = vmatprep.subr.mxu0 0.0
    %867 = vmatpush2.msra.mxu0 0.0
    %868 = vmatprep.subr.mxu0 0.0
    %869 = vmatpush2.msra.mxu0 0.0
    %870 = vmatprep.subr.mxu0 0.0
    %871 = vmatpush2.msra.mxu0 0.0
    %872 = vmatprep.subr.mxu0 0.0
    %873 = vmatpush2.msra.mxu0 0.0
    %874 = vmatprep.mubr.f32.mxu0 0.0
    %875 = vmatmul.mubr.f32.gmra.mxu0 %v802
    %v876 = vpop.f32.mrf.mxu0
    %v877 = vadd.f32 %v113, %v876
    %v878 = vpop.f32.mrf.mxu0
    %879 = vmatprep.mubr.f32.mxu0 0.0
    %880 = vmatmul.mubr.f32.gmra.mxu0 %v803
    %v881 = vpop.f32.mrf.mxu0
    %v882 = vadd.f32 %v114, %v881
    %v883 = vpop.f32.mrf.mxu0
    %884 = vmatprep.mubr.f32.mxu0 0.0
    %885 = vmatmul.mubr.f32.gmra.mxu0 %v804
    %v886 = vpop.f32.mrf.mxu0
    %v887 = vadd.f32 %v115, %v886
    %v888 = vpop.f32.mrf.mxu0
    %889 = vmatprep.mubr.f32.mxu0 0.0
    %890 = vmatmul.mubr.f32.gmra.mxu0 %v805
    %v891 = vpop.f32.mrf.mxu0
    %v892 = vadd.f32 %v116, %v891
    %v893 = vpop.f32.mrf.mxu0
    %894 = vmatprep.mubr.f32.mxu0 0.0
    %895 = vmatmul.mubr.f32.gmra.mxu0 %v806
    %v896 = vpop.f32.mrf.mxu0
    %v897 = vadd.f32 %v117, %v896
    %v898 = vpop.f32.mrf.mxu0
    %899 = vmatprep.mubr.f32.mxu0 0.0
    %900 = vmatmul.mubr.f32.gmra.mxu0 %v807
    %v901 = vpop.f32.mrf.mxu0
    %v902 = vadd.f32 %v118, %v901
    %v903 = vpop.f32.mrf.mxu0
    %904 = vmatprep.mubr.f32.mxu0 0.0
    %905 = vmatmul.mubr.f32.gmra.mxu0 %v808
    %v906 = vpop.f32.mrf.mxu0
    %v907 = vadd.f32 %v119, %v906
    %v908 = vpop.f32.mrf.mxu0
    %909 = vmatprep.mubr.f32.mxu0 0.0
    %910 = vmatmul.mubr.f32.gmra.mxu0 %v809
    %v911 = vpop.f32.mrf.mxu0
    %v912 = vadd.f32 %v120, %v911
    %v913 = vpop.f32.mrf.mxu0
    %914 = vdwg.mxu0
    %vm915 = vcmask 523264
    %916 = vst.msk [vmem:[#allocation8] sm:$0xff] %vm915, %v877
    %917 = vst.msk [vmem:[#allocation8 + $0x8] sm:$0xff] %vm915, %v882
    %918 = vst.msk [vmem:[#allocation8 + $0x10] sm:$0xff] %vm915, %v887
    %919 = vst.msk [vmem:[#allocation8 + $0x18] sm:$0xff] %vm915, %v892
    %920 = vst.msk [vmem:[#allocation8 + $0x20] sm:$0xff] %vm915, %v897
    %921 = vst.msk [vmem:[#allocation8 + $0x28] sm:$0xff] %vm915, %v902
    %922 = vst.msk [vmem:[#allocation8 + $0x30] sm:$0xff] %vm915, %v907
    %923 = vst.msk [vmem:[#allocation8 + $0x38] sm:$0xff] %vm915, %v912
    %v924 = vld [vmem:[#allocation3 + $0x8] sm:$0xff]
    %v925 = vld [vmem:[#allocation3 + $0x18] sm:$0xff]
    %v926 = vld [vmem:[#allocation3 + $0x28] sm:$0xff]
    %v927 = vld [vmem:[#allocation3 + $0x38] sm:$0xff]
    %928 = vmatprep.subr.mxu0 0.0
    %929 = vmatpush1.msra.mxu0 0.0
    %930 = vmatprep.subr.mxu0 0.0
    %931 = vmatpush1.msra.mxu0 0.0
    %932 = vmatprep.subr.mxu0 0.0
    %933 = vmatpush1.msra.mxu0 0.0
    %934 = vmatprep.subr.mxu0 0.0
    %935 = vmatpush1.msra.mxu0 0.0
    %936 = vmatprep.subr.mxu0 0.0
    %937 = vmatpush1.msra.mxu0 0.0
    %938 = vmatprep.subr.mxu0 0.0
    %939 = vmatpush1.msra.mxu0 0.0
    %940 = vmatprep.subr.mxu0 0.0
    %941 = vmatpush1.msra.mxu0 0.0
    %942 = vmatprep.subr.mxu0 0.0
    %943 = vmatpush1.msra.mxu0 0.0
    %944 = vmatprep.subr.mxu0 0.0
    %945 = vmatpush1.msra.mxu0 0.0
    %946 = vmatprep.subr.mxu0 0.0
    %947 = vmatpush1.msra.mxu0 0.0
    %948 = vmatprep.subr.mxu0 0.0
    %949 = vmatpush1.msra.mxu0 0.0
    %950 = vmatprep.subr.mxu0 0.0
    %951 = vmatpush1.msra.mxu0 0.0
    %952 = vmatprep.subr.mxu0 0.0
    %953 = vmatpush1.msra.mxu0 %v927
    %954 = vmatprep.subr.mxu0 0.0
    %955 = vmatpush1.msra.mxu0 %v926
    %956 = vmatprep.subr.mxu0 0.0
    %957 = vmatpush1.msra.mxu0 %v925
    %958 = vmatprep.subr.mxu0 0.0
    %959 = vmatpush1.msra.mxu0 %v924
    %960 = vmatprep.subr.mxu0 0.0
    %961 = vmatpush2.msra.mxu0 0.0
    %962 = vmatprep.subr.mxu0 0.0
    %963 = vmatpush2.msra.mxu0 0.0
    %964 = vmatprep.subr.mxu0 0.0
    %965 = vmatpush2.msra.mxu0 0.0
    %966 = vmatprep.subr.mxu0 0.0
    %967 = vmatpush2.msra.mxu0 0.0
    %968 = vmatprep.subr.mxu0 0.0
    %969 = vmatpush2.msra.mxu0 0.0
    %970 = vmatprep.subr.mxu0 0.0
    %971 = vmatpush2.msra.mxu0 0.0
    %972 = vmatprep.subr.mxu0 0.0
    %973 = vmatpush2.msra.mxu0 0.0
    %974 = vmatprep.subr.mxu0 0.0
    %975 = vmatpush2.msra.mxu0 0.0
    %976 = vmatprep.subr.mxu0 0.0
    %977 = vmatpush2.msra.mxu0 0.0
    %978 = vmatprep.subr.mxu0 0.0
    %979 = vmatpush2.msra.mxu0 0.0
    %980 = vmatprep.subr.mxu0 0.0
    %981 = vmatpush2.msra.mxu0 0.0
    %982 = vmatprep.subr.mxu0 0.0
    %983 = vmatpush2.msra.mxu0 0.0
    %984 = vmatprep.subr.mxu0 0.0
    %985 = vmatpush2.msra.mxu0 0.0
    %986 = vmatprep.subr.mxu0 0.0
    %987 = vmatpush2.msra.mxu0 0.0
    %988 = vmatprep.subr.mxu0 0.0
    %989 = vmatpush2.msra.mxu0 0.0
    %990 = vmatprep.subr.mxu0 0.0
    %991 = vmatpush2.msra.mxu0 0.0
    %992 = vmatprep.mubr.f32.mxu0 0.0
    %993 = vmatmul.mubr.f32.gmra.mxu0 %v149
    %v994 = vpop.f32.mrf.mxu0
    %v995 = vadd.f32 0.0, %v994
    %v996 = vpop.f32.mrf.mxu0
    %997 = vmatprep.mubr.f32.mxu0 0.0
    %998 = vmatmul.mubr.f32.gmra.mxu0 %v152
    %v999 = vpop.f32.mrf.mxu0
    %v1000 = vadd.f32 0.0, %v999
    %v1001 = vpop.f32.mrf.mxu0
    %1002 = vmatprep.mubr.f32.mxu0 0.0
    %1003 = vmatmul.mubr.f32.gmra.mxu0 %v155
    %v1004 = vpop.f32.mrf.mxu0
    %v1005 = vadd.f32 0.0, %v1004
    %v1006 = vpop.f32.mrf.mxu0
    %1007 = vmatprep.mubr.f32.mxu0 0.0
    %1008 = vmatmul.mubr.f32.gmra.mxu0 %v158
    %v1009 = vpop.f32.mrf.mxu0
    %v1010 = vadd.f32 0.0, %v1009
    %v1011 = vpop.f32.mrf.mxu0
    %1012 = vmatprep.mubr.f32.mxu0 0.0
    %1013 = vmatmul.mubr.f32.gmra.mxu0 %v161
    %v1014 = vpop.f32.mrf.mxu0
    %v1015 = vadd.f32 0.0, %v1014
    %v1016 = vpop.f32.mrf.mxu0
    %1017 = vmatprep.mubr.f32.mxu0 0.0
    %1018 = vmatmul.mubr.f32.gmra.mxu0 %v164
    %v1019 = vpop.f32.mrf.mxu0
    %v1020 = vadd.f32 0.0, %v1019
    %v1021 = vpop.f32.mrf.mxu0
    %1022 = vmatprep.mubr.f32.mxu0 0.0
    %1023 = vmatmul.mubr.f32.gmra.mxu0 %v167
    %v1024 = vpop.f32.mrf.mxu0
    %v1025 = vadd.f32 0.0, %v1024
    %v1026 = vpop.f32.mrf.mxu0
    %1027 = vmatprep.mubr.f32.mxu0 0.0
    %1028 = vmatmul.mubr.f32.gmra.mxu0 %v170
    %v1029 = vpop.f32.mrf.mxu0
    %v1030 = vadd.f32 0.0, %v1029
    %v1031 = vpop.f32.mrf.mxu0
    %1032 = vdwg.mxu0
    %1033 = vmatprep.subr.mxu0 0.0
    %1034 = vmatpush1.msra.mxu0 %v80
    %1035 = vmatprep.subr.mxu0 0.0
    %1036 = vmatpush1.msra.mxu0 %v79
    %1037 = vmatprep.subr.mxu0 0.0
    %1038 = vmatpush1.msra.mxu0 %v78
    %1039 = vmatprep.subr.mxu0 0.0
    %1040 = vmatpush1.msra.mxu0 %v77
    %1041 = vmatprep.subr.mxu0 0.0
    %1042 = vmatpush1.msra.mxu0 %v76
    %1043 = vmatprep.subr.mxu0 0.0
    %1044 = vmatpush1.msra.mxu0 %v75
    %1045 = vmatprep.subr.mxu0 0.0
    %1046 = vmatpush1.msra.mxu0 %v74
    %1047 = vmatprep.subr.mxu0 0.0
    %1048 = vmatpush1.msra.mxu0 %v73
    %1049 = vmatprep.subr.mxu0 0.0
    %1050 = vmatpush1.msra.mxu0 %v72
    %1051 = vmatprep.subr.mxu0 0.0
    %1052 = vmatpush1.msra.mxu0 %v71
    %1053 = vmatprep.subr.mxu0 0.0
    %1054 = vmatpush1.msra.mxu0 %v70
    %1055 = vmatprep.subr.mxu0 0.0
    %1056 = vmatpush1.msra.mxu0 %v69
    %1057 = vmatprep.subr.mxu0 0.0
    %1058 = vmatpush1.msra.mxu0 %v68
    %1059 = vmatprep.subr.mxu0 0.0
    %1060 = vmatpush1.msra.mxu0 %v67
    %1061 = vmatprep.subr.mxu0 0.0
    %1062 = vmatpush1.msra.mxu0 %v66
    %1063 = vmatprep.subr.mxu0 0.0
    %1064 = vmatpush1.msra.mxu0 %v65
    %1065 = vmatprep.subr.mxu0 0.0
    %1066 = vmatpush2.msra.mxu0 0.0
    %1067 = vmatprep.subr.mxu0 0.0
    %1068 = vmatpush2.msra.mxu0 0.0
    %1069 = vmatprep.subr.mxu0 0.0
    %1070 = vmatpush2.msra.mxu0 0.0
    %1071 = vmatprep.subr.mxu0 0.0
    %1072 = vmatpush2.msra.mxu0 0.0
    %1073 = vmatprep.subr.mxu0 0.0
    %1074 = vmatpush2.msra.mxu0 0.0
    %1075 = vmatprep.subr.mxu0 0.0
    %1076 = vmatpush2.msra.mxu0 0.0
    %1077 = vmatprep.subr.mxu0 0.0
    %1078 = vmatpush2.msra.mxu0 0.0
    %1079 = vmatprep.subr.mxu0 0.0
    %1080 = vmatpush2.msra.mxu0 0.0
    %1081 = vmatprep.subr.mxu0 0.0
    %1082 = vmatpush2.msra.mxu0 0.0
    %1083 = vmatprep.subr.mxu0 0.0
    %1084 = vmatpush2.msra.mxu0 0.0
    %1085 = vmatprep.subr.mxu0 0.0
    %1086 = vmatpush2.msra.mxu0 0.0
    %1087 = vmatprep.subr.mxu0 0.0
    %1088 = vmatpush2.msra.mxu0 0.0
    %1089 = vmatprep.subr.mxu0 0.0
    %1090 = vmatpush2.msra.mxu0 0.0
    %1091 = vmatprep.subr.mxu0 0.0
    %1092 = vmatpush2.msra.mxu0 0.0
    %1093 = vmatprep.subr.mxu0 0.0
    %1094 = vmatpush2.msra.mxu0 0.0
    %1095 = vmatprep.subr.mxu0 0.0
    %1096 = vmatpush2.msra.mxu0 0.0
    %1097 = vmatprep.mubr.f32.mxu0 0.0
    %1098 = vmatmul.mubr.f32.gmra.mxu0 %v995
    %v1099 = vpop.f32.mrf.mxu0
    %v1100 = vadd.f32 0.0, %v1099
    %v1101 = vpop.f32.mrf.mxu0
    %1102 = vmatprep.mubr.f32.mxu0 0.0
    %1103 = vmatmul.mubr.f32.gmra.mxu0 %v1000
    %v1104 = vpop.f32.mrf.mxu0
    %v1105 = vadd.f32 0.0, %v1104
    %v1106 = vpop.f32.mrf.mxu0
    %1107 = vmatprep.mubr.f32.mxu0 0.0
    %1108 = vmatmul.mubr.f32.gmra.mxu0 %v1005
    %v1109 = vpop.f32.mrf.mxu0
    %v1110 = vadd.f32 0.0, %v1109
    %v1111 = vpop.f32.mrf.mxu0
    %1112 = vmatprep.mubr.f32.mxu0 0.0
    %1113 = vmatmul.mubr.f32.gmra.mxu0 %v1010
    %v1114 = vpop.f32.mrf.mxu0
    %v1115 = vadd.f32 0.0, %v1114
    %v1116 = vpop.f32.mrf.mxu0
    %1117 = vmatprep.mubr.f32.mxu0 0.0
    %1118 = vmatmul.mubr.f32.gmra.mxu0 %v1015
    %v1119 = vpop.f32.mrf.mxu0
    %v1120 = vadd.f32 0.0, %v1119
    %v1121 = vpop.f32.mrf.mxu0
    %1122 = vmatprep.mubr.f32.mxu0 0.0
    %1123 = vmatmul.mubr.f32.gmra.mxu0 %v1020
    %v1124 = vpop.f32.mrf.mxu0
    %v1125 = vadd.f32 0.0, %v1124
    %v1126 = vpop.f32.mrf.mxu0
    %1127 = vmatprep.mubr.f32.mxu0 0.0
    %1128 = vmatmul.mubr.f32.gmra.mxu0 %v1025
    %v1129 = vpop.f32.mrf.mxu0
    %v1130 = vadd.f32 0.0, %v1129
    %v1131 = vpop.f32.mrf.mxu0
    %1132 = vmatprep.mubr.f32.mxu0 0.0
    %1133 = vmatmul.mubr.f32.gmra.mxu0 %v1030
    %v1134 = vpop.f32.mrf.mxu0
    %v1135 = vadd.f32 0.0, %v1134
    %v1136 = vpop.f32.mrf.mxu0
    %1137 = vdwg.mxu0
    %1138 = vrot.lane.b32.xlu0 %v1100, 1
    %v1139 = vpop.permute.xlu0 %1138
    %1140 = vrot.lane.b32.xlu0 %v1105, 1
    %v1141 = vpop.permute.xlu0 %1140
    %1142 = vrot.lane.b32.xlu0 %v1110, 1
    %v1143 = vpop.permute.xlu0 %1142
    %1144 = vrot.lane.b32.xlu0 %v1115, 1
    %v1145 = vpop.permute.xlu0 %1144
    %1146 = vrot.lane.b32.xlu0 %v1120, 1
    %v1147 = vpop.permute.xlu0 %1146
    %1148 = vrot.lane.b32.xlu0 %v1125, 1
    %v1149 = vpop.permute.xlu0 %1148
    %1150 = vrot.lane.b32.xlu0 %v1130, 1
    %v1151 = vpop.permute.xlu0 %1150
    %1152 = vrot.lane.b32.xlu0 %v1135, 1
    %v1153 = vpop.permute.xlu0 %1152
    %1154 = vrot.lane.b32.xlu0 %v1100, 127
    %v1155 = vpop.permute.xlu0 %1154
    %1156 = vrot.lane.b32.xlu0 %v1105, 127
    %v1157 = vpop.permute.xlu0 %1156
    %1158 = vrot.lane.b32.xlu0 %v1110, 127
    %v1159 = vpop.permute.xlu0 %1158
    %1160 = vrot.lane.b32.xlu0 %v1115, 127
    %v1161 = vpop.permute.xlu0 %1160
    %1162 = vrot.lane.b32.xlu0 %v1120, 127
    %v1163 = vpop.permute.xlu0 %1162
    %1164 = vrot.lane.b32.xlu0 %v1125, 127
    %v1165 = vpop.permute.xlu0 %1164
    %1166 = vrot.lane.b32.xlu0 %v1130, 127
    %v1167 = vpop.permute.xlu0 %1166
    %1168 = vrot.lane.b32.xlu0 %v1135, 127
    %v1169 = vpop.permute.xlu0 %1168
    %v1170 = vsel %vm135, %v1139, %v1100
    %v1171 = vsel %vm135, %v1141, %v1105
    %v1172 = vsel %vm135, %v1143, %v1110
    %v1173 = vsel %vm135, %v1145, %v1115
    %v1174 = vsel %vm135, %v1147, %v1120
    %v1175 = vsel %vm135, %v1149, %v1125
    %v1176 = vsel %vm135, %v1151, %v1130
    %v1177 = vsel %vm135, %v1153, %v1135
    %v1178 = vmax.f32 %v1100, %v1170
    %v1179 = vmax.f32 %v1105, %v1171
    %v1180 = vmax.f32 %v1110, %v1172
    %v1181 = vmax.f32 %v1115, %v1173
    %v1182 = vmax.f32 %v1120, %v1174
    %v1183 = vmax.f32 %v1125, %v1175
    %v1184 = vmax.f32 %v1130, %v1176
    %v1185 = vmax.f32 %v1135, %v1177
    %v1186 = vsel %vm136, %v1155, %v1178
    %v1187 = vsel %vm136, %v1157, %v1179
    %v1188 = vsel %vm136, %v1159, %v1180
    %v1189 = vsel %vm136, %v1161, %v1181
    %v1190 = vsel %vm136, %v1163, %v1182
    %v1191 = vsel %vm136, %v1165, %v1183
    %v1192 = vsel %vm136, %v1167, %v1184
    %v1193 = vsel %vm136, %v1169, %v1185
    %v1194 = vmax.f32 %v1178, %v1186
    %v1195 = vmax.f32 %v1179, %v1187
    %v1196 = vmax.f32 %v1180, %v1188
    %v1197 = vmax.f32 %v1181, %v1189
    %v1198 = vmax.f32 %v1182, %v1190
    %v1199 = vmax.f32 %v1183, %v1191
    %v1200 = vmax.f32 %v1184, %v1192
    %v1201 = vmax.f32 %v1185, %v1193
    %1202 = vrot.lane.b32.xlu0 %v1194, 2
    %v1203 = vpop.permute.xlu0 %1202
    %1204 = vrot.lane.b32.xlu0 %v1195, 2
    %v1205 = vpop.permute.xlu0 %1204
    %1206 = vrot.lane.b32.xlu0 %v1196, 2
    %v1207 = vpop.permute.xlu0 %1206
    %1208 = vrot.lane.b32.xlu0 %v1197, 2
    %v1209 = vpop.permute.xlu0 %1208
    %1210 = vrot.lane.b32.xlu0 %v1198, 2
    %v1211 = vpop.permute.xlu0 %1210
    %1212 = vrot.lane.b32.xlu0 %v1199, 2
    %v1213 = vpop.permute.xlu0 %1212
    %1214 = vrot.lane.b32.xlu0 %v1200, 2
    %v1215 = vpop.permute.xlu0 %1214
    %1216 = vrot.lane.b32.xlu0 %v1201, 2
    %v1217 = vpop.permute.xlu0 %1216
    %1218 = vrot.lane.b32.xlu0 %v1194, 126
    %v1219 = vpop.permute.xlu0 %1218
    %1220 = vrot.lane.b32.xlu0 %v1195, 126
    %v1221 = vpop.permute.xlu0 %1220
    %1222 = vrot.lane.b32.xlu0 %v1196, 126
    %v1223 = vpop.permute.xlu0 %1222
    %1224 = vrot.lane.b32.xlu0 %v1197, 126
    %v1225 = vpop.permute.xlu0 %1224
    %1226 = vrot.lane.b32.xlu0 %v1198, 126
    %v1227 = vpop.permute.xlu0 %1226
    %1228 = vrot.lane.b32.xlu0 %v1199, 126
    %v1229 = vpop.permute.xlu0 %1228
    %1230 = vrot.lane.b32.xlu0 %v1200, 126
    %v1231 = vpop.permute.xlu0 %1230
    %1232 = vrot.lane.b32.xlu0 %v1201, 126
    %v1233 = vpop.permute.xlu0 %1232
    %v1234 = vsel %vm137, %v1203, %v1194
    %v1235 = vsel %vm137, %v1205, %v1195
    %v1236 = vsel %vm137, %v1207, %v1196
    %v1237 = vsel %vm137, %v1209, %v1197
    %v1238 = vsel %vm137, %v1211, %v1198
    %v1239 = vsel %vm137, %v1213, %v1199
    %v1240 = vsel %vm137, %v1215, %v1200
    %v1241 = vsel %vm137, %v1217, %v1201
    %v1242 = vmax.f32 %v1194, %v1234
    %v1243 = vmax.f32 %v1195, %v1235
    %v1244 = vmax.f32 %v1196, %v1236
    %v1245 = vmax.f32 %v1197, %v1237
    %v1246 = vmax.f32 %v1198, %v1238
    %v1247 = vmax.f32 %v1199, %v1239
    %v1248 = vmax.f32 %v1200, %v1240
    %v1249 = vmax.f32 %v1201, %v1241
    %v1250 = vsel %vm138, %v1219, %v1242
    %v1251 = vsel %vm138, %v1221, %v1243
    %v1252 = vsel %vm138, %v1223, %v1244
    %v1253 = vsel %vm138, %v1225, %v1245
    %v1254 = vsel %vm138, %v1227, %v1246
    %v1255 = vsel %vm138, %v1229, %v1247
    %v1256 = vsel %vm138, %v1231, %v1248
    %v1257 = vsel %vm138, %v1233, %v1249
    %v1258 = vmax.f32 %v1242, %v1250
    %v1259 = vmax.f32 %v1243, %v1251
    %v1260 = vmax.f32 %v1244, %v1252
    %v1261 = vmax.f32 %v1245, %v1253
    %v1262 = vmax.f32 %v1246, %v1254
    %v1263 = vmax.f32 %v1247, %v1255
    %v1264 = vmax.f32 %v1248, %v1256
    %v1265 = vmax.f32 %v1249, %v1257
    %1266 = vrot.lane.b32.xlu0 %v1258, 4
    %v1267 = vpop.permute.xlu0 %1266
    %1268 = vrot.lane.b32.xlu0 %v1259, 4
    %v1269 = vpop.permute.xlu0 %1268
    %1270 = vrot.lane.b32.xlu0 %v1260, 4
    %v1271 = vpop.permute.xlu0 %1270
    %1272 = vrot.lane.b32.xlu0 %v1261, 4
    %v1273 = vpop.permute.xlu0 %1272
    %1274 = vrot.lane.b32.xlu0 %v1262, 4
    %v1275 = vpop.permute.xlu0 %1274
    %1276 = vrot.lane.b32.xlu0 %v1263, 4
    %v1277 = vpop.permute.xlu0 %1276
    %1278 = vrot.lane.b32.xlu0 %v1264, 4
    %v1279 = vpop.permute.xlu0 %1278
    %1280 = vrot.lane.b32.xlu0 %v1265, 4
    %v1281 = vpop.permute.xlu0 %1280
    %1282 = vrot.lane.b32.xlu0 %v1258, 124
    %v1283 = vpop.permute.xlu0 %1282
    %1284 = vrot.lane.b32.xlu0 %v1259, 124
    %v1285 = vpop.permute.xlu0 %1284
    %1286 = vrot.lane.b32.xlu0 %v1260, 124
    %v1287 = vpop.permute.xlu0 %1286
    %1288 = vrot.lane.b32.xlu0 %v1261, 124
    %v1289 = vpop.permute.xlu0 %1288
    %1290 = vrot.lane.b32.xlu0 %v1262, 124
    %v1291 = vpop.permute.xlu0 %1290
    %1292 = vrot.lane.b32.xlu0 %v1263, 124
    %v1293 = vpop.permute.xlu0 %1292
    %1294 = vrot.lane.b32.xlu0 %v1264, 124
    %v1295 = vpop.permute.xlu0 %1294
    %1296 = vrot.lane.b32.xlu0 %v1265, 124
    %v1297 = vpop.permute.xlu0 %1296
    %v1298 = vsel %vm139, %v1267, %v1258
    %v1299 = vsel %vm139, %v1269, %v1259
    %v1300 = vsel %vm139, %v1271, %v1260
    %v1301 = vsel %vm139, %v1273, %v1261
    %v1302 = vsel %vm139, %v1275, %v1262
    %v1303 = vsel %vm139, %v1277, %v1263
    %v1304 = vsel %vm139, %v1279, %v1264
    %v1305 = vsel %vm139, %v1281, %v1265
    %v1306 = vmax.f32 %v1258, %v1298
    %v1307 = vmax.f32 %v1259, %v1299
    %v1308 = vmax.f32 %v1260, %v1300
    %v1309 = vmax.f32 %v1261, %v1301
    %v1310 = vmax.f32 %v1262, %v1302
    %v1311 = vmax.f32 %v1263, %v1303
    %v1312 = vmax.f32 %v1264, %v1304
    %v1313 = vmax.f32 %v1265, %v1305
    %v1314 = vsel %vm140, %v1283, %v1306
    %v1315 = vsel %vm140, %v1285, %v1307
    %v1316 = vsel %vm140, %v1287, %v1308
    %v1317 = vsel %vm140, %v1289, %v1309
    %v1318 = vsel %vm140, %v1291, %v1310
    %v1319 = vsel %vm140, %v1293, %v1311
    %v1320 = vsel %vm140, %v1295, %v1312
    %v1321 = vsel %vm140, %v1297, %v1313
    %v1322 = vmax.f32 %v1306, %v1314
    %v1323 = vmax.f32 %v1307, %v1315
    %v1324 = vmax.f32 %v1308, %v1316
    %v1325 = vmax.f32 %v1309, %v1317
    %v1326 = vmax.f32 %v1310, %v1318
    %v1327 = vmax.f32 %v1311, %v1319
    %v1328 = vmax.f32 %v1312, %v1320
    %v1329 = vmax.f32 %v1313, %v1321
    %1330 = vrot.lane.b32.xlu0 %v1322, 8
    %v1331 = vpop.permute.xlu0 %1330
    %1332 = vrot.lane.b32.xlu0 %v1323, 8
    %v1333 = vpop.permute.xlu0 %1332
    %1334 = vrot.lane.b32.xlu0 %v1324, 8
    %v1335 = vpop.permute.xlu0 %1334
    %1336 = vrot.lane.b32.xlu0 %v1325, 8
    %v1337 = vpop.permute.xlu0 %1336
    %1338 = vrot.lane.b32.xlu0 %v1326, 8
    %v1339 = vpop.permute.xlu0 %1338
    %1340 = vrot.lane.b32.xlu0 %v1327, 8
    %v1341 = vpop.permute.xlu0 %1340
    %1342 = vrot.lane.b32.xlu0 %v1328, 8
    %v1343 = vpop.permute.xlu0 %1342
    %1344 = vrot.lane.b32.xlu0 %v1329, 8
    %v1345 = vpop.permute.xlu0 %1344
    %1346 = vrot.lane.b32.xlu0 %v1322, 120
    %v1347 = vpop.permute.xlu0 %1346
    %1348 = vrot.lane.b32.xlu0 %v1323, 120
    %v1349 = vpop.permute.xlu0 %1348
    %1350 = vrot.lane.b32.xlu0 %v1324, 120
    %v1351 = vpop.permute.xlu0 %1350
    %1352 = vrot.lane.b32.xlu0 %v1325, 120
    %v1353 = vpop.permute.xlu0 %1352
    %1354 = vrot.lane.b32.xlu0 %v1326, 120
    %v1355 = vpop.permute.xlu0 %1354
    %1356 = vrot.lane.b32.xlu0 %v1327, 120
    %v1357 = vpop.permute.xlu0 %1356
    %1358 = vrot.lane.b32.xlu0 %v1328, 120
    %v1359 = vpop.permute.xlu0 %1358
    %1360 = vrot.lane.b32.xlu0 %v1329, 120
    %v1361 = vpop.permute.xlu0 %1360
    %v1362 = vsel %vm141, %v1331, %v1322
    %v1363 = vsel %vm141, %v1333, %v1323
    %v1364 = vsel %vm141, %v1335, %v1324
    %v1365 = vsel %vm141, %v1337, %v1325
    %v1366 = vsel %vm141, %v1339, %v1326
    %v1367 = vsel %vm141, %v1341, %v1327
    %v1368 = vsel %vm141, %v1343, %v1328
    %v1369 = vsel %vm141, %v1345, %v1329
    %v1370 = vmax.f32 %v1322, %v1362
    %v1371 = vmax.f32 %v1323, %v1363
    %v1372 = vmax.f32 %v1324, %v1364
    %v1373 = vmax.f32 %v1325, %v1365
    %v1374 = vmax.f32 %v1326, %v1366
    %v1375 = vmax.f32 %v1327, %v1367
    %v1376 = vmax.f32 %v1328, %v1368
    %v1377 = vmax.f32 %v1329, %v1369
    %v1378 = vsel %vm142, %v1347, %v1370
    %v1379 = vsel %vm142, %v1349, %v1371
    %v1380 = vsel %vm142, %v1351, %v1372
    %v1381 = vsel %vm142, %v1353, %v1373
    %v1382 = vsel %vm142, %v1355, %v1374
    %v1383 = vsel %vm142, %v1357, %v1375
    %v1384 = vsel %vm142, %v1359, %v1376
    %v1385 = vsel %vm142, %v1361, %v1377
    %v1386 = vmax.f32 %v1370, %v1378
    %v1387 = vmax.f32 %v1371, %v1379
    %v1388 = vmax.f32 %v1372, %v1380
    %v1389 = vmax.f32 %v1373, %v1381
    %v1390 = vmax.f32 %v1374, %v1382
    %v1391 = vmax.f32 %v1375, %v1383
    %v1392 = vmax.f32 %v1376, %v1384
    %v1393 = vmax.f32 %v1377, %v1385
    %v1394 = vsub.f32 %v1100, %v1386
    %v1395 = vsub.f32 %v1105, %v1387
    %v1396 = vsub.f32 %v1110, %v1388
    %v1397 = vsub.f32 %v1115, %v1389
    %v1398 = vsub.f32 %v1120, %v1390
    %v1399 = vsub.f32 %v1125, %v1391
    %v1400 = vsub.f32 %v1130, %v1392
    %v1401 = vsub.f32 %v1135, %v1393
    %v1402 = vmul.f32 %v1394, 1.442695
    %v1403 = vpow.pop %v1402
    %v1404 = vmul.f32 %v1395, 1.442695
    %v1405 = vpow.pop %v1404
    %v1406 = vmul.f32 %v1396, 1.442695
    %v1407 = vpow.pop %v1406
    %v1408 = vmul.f32 %v1397, 1.442695
    %v1409 = vpow.pop %v1408
    %v1410 = vmul.f32 %v1398, 1.442695
    %v1411 = vpow.pop %v1410
    %v1412 = vmul.f32 %v1399, 1.442695
    %v1413 = vpow.pop %v1412
    %v1414 = vmul.f32 %v1400, 1.442695
    %v1415 = vpow.pop %v1414
    %v1416 = vmul.f32 %v1401, 1.442695
    %v1417 = vpow.pop %v1416
    %1418 = vmatprep.subr.mxu0 0.0
    %1419 = vmatpush1.msra.mxu0 %v96
    %1420 = vmatprep.subr.mxu0 0.0
    %1421 = vmatpush1.msra.mxu0 %v95
    %1422 = vmatprep.subr.mxu0 0.0
    %1423 = vmatpush1.msra.mxu0 %v94
    %1424 = vmatprep.subr.mxu0 0.0
    %1425 = vmatpush1.msra.mxu0 %v93
    %1426 = vmatprep.subr.mxu0 0.0
    %1427 = vmatpush1.msra.mxu0 %v92
    %1428 = vmatprep.subr.mxu0 0.0
    %1429 = vmatpush1.msra.mxu0 %v91
    %1430 = vmatprep.subr.mxu0 0.0
    %1431 = vmatpush1.msra.mxu0 %v90
    %1432 = vmatprep.subr.mxu0 0.0
    %1433 = vmatpush1.msra.mxu0 %v89
    %1434 = vmatprep.subr.mxu0 0.0
    %1435 = vmatpush1.msra.mxu0 %v88
    %1436 = vmatprep.subr.mxu0 0.0
    %1437 = vmatpush1.msra.mxu0 %v87
    %1438 = vmatprep.subr.mxu0 0.0
    %1439 = vmatpush1.msra.mxu0 %v86
    %1440 = vmatprep.subr.mxu0 0.0
    %1441 = vmatpush1.msra.mxu0 %v85
    %1442 = vmatprep.subr.mxu0 0.0
    %1443 = vmatpush1.msra.mxu0 %v84
    %1444 = vmatprep.subr.mxu0 0.0
    %1445 = vmatpush1.msra.mxu0 %v83
    %1446 = vmatprep.subr.mxu0 0.0
    %1447 = vmatpush1.msra.mxu0 %v82
    %1448 = vmatprep.subr.mxu0 0.0
    %1449 = vmatpush1.msra.mxu0 %v81
    %1450 = vmatprep.subr.mxu0 0.0
    %1451 = vmatpush2.msra.mxu0 0.0
    %1452 = vmatprep.subr.mxu0 0.0
    %1453 = vmatpush2.msra.mxu0 0.0
    %1454 = vmatprep.subr.mxu0 0.0
    %1455 = vmatpush2.msra.mxu0 0.0
    %1456 = vmatprep.subr.mxu0 0.0
    %1457 = vmatpush2.msra.mxu0 0.0
    %1458 = vmatprep.subr.mxu0 0.0
    %1459 = vmatpush2.msra.mxu0 0.0
    %1460 = vmatprep.subr.mxu0 0.0
    %1461 = vmatpush2.msra.mxu0 0.0
    %1462 = vmatprep.subr.mxu0 0.0
    %1463 = vmatpush2.msra.mxu0 0.0
    %1464 = vmatprep.subr.mxu0 0.0
    %1465 = vmatpush2.msra.mxu0 0.0
    %1466 = vmatprep.subr.mxu0 0.0
    %1467 = vmatpush2.msra.mxu0 0.0
    %1468 = vmatprep.subr.mxu0 0.0
    %1469 = vmatpush2.msra.mxu0 0.0
    %1470 = vmatprep.subr.mxu0 0.0
    %1471 = vmatpush2.msra.mxu0 0.0
    %1472 = vmatprep.subr.mxu0 0.0
    %1473 = vmatpush2.msra.mxu0 0.0
    %1474 = vmatprep.subr.mxu0 0.0
    %1475 = vmatpush2.msra.mxu0 0.0
    %1476 = vmatprep.subr.mxu0 0.0
    %1477 = vmatpush2.msra.mxu0 0.0
    %1478 = vmatprep.subr.mxu0 0.0
    %1479 = vmatpush2.msra.mxu0 0.0
    %1480 = vmatprep.subr.mxu0 0.0
    %1481 = vmatpush2.msra.mxu0 0.0
    %1482 = vmatprep.mubr.f32.mxu0 0.0
    %1483 = vmatmul.mubr.f32.gmra.mxu0 %v1403
    %v1484 = vpop.f32.mrf.mxu0
    %v1485 = vadd.f32 0.0, %v1484
    %v1486 = vpop.f32.mrf.mxu0
    %1487 = vmatprep.mubr.f32.mxu0 0.0
    %1488 = vmatmul.mubr.f32.gmra.mxu0 %v1405
    %v1489 = vpop.f32.mrf.mxu0
    %v1490 = vadd.f32 0.0, %v1489
    %v1491 = vpop.f32.mrf.mxu0
    %1492 = vmatprep.mubr.f32.mxu0 0.0
    %1493 = vmatmul.mubr.f32.gmra.mxu0 %v1407
    %v1494 = vpop.f32.mrf.mxu0
    %v1495 = vadd.f32 0.0, %v1494
    %v1496 = vpop.f32.mrf.mxu0
    %1497 = vmatprep.mubr.f32.mxu0 0.0
    %1498 = vmatmul.mubr.f32.gmra.mxu0 %v1409
    %v1499 = vpop.f32.mrf.mxu0
    %v1500 = vadd.f32 0.0, %v1499
    %v1501 = vpop.f32.mrf.mxu0
    %1502 = vmatprep.mubr.f32.mxu0 0.0
    %1503 = vmatmul.mubr.f32.gmra.mxu0 %v1411
    %v1504 = vpop.f32.mrf.mxu0
    %v1505 = vadd.f32 0.0, %v1504
    %v1506 = vpop.f32.mrf.mxu0
    %1507 = vmatprep.mubr.f32.mxu0 0.0
    %1508 = vmatmul.mubr.f32.gmra.mxu0 %v1413
    %v1509 = vpop.f32.mrf.mxu0
    %v1510 = vadd.f32 0.0, %v1509
    %v1511 = vpop.f32.mrf.mxu0
    %1512 = vmatprep.mubr.f32.mxu0 0.0
    %1513 = vmatmul.mubr.f32.gmra.mxu0 %v1415
    %v1514 = vpop.f32.mrf.mxu0
    %v1515 = vadd.f32 0.0, %v1514
    %v1516 = vpop.f32.mrf.mxu0
    %1517 = vmatprep.mubr.f32.mxu0 0.0
    %1518 = vmatmul.mubr.f32.gmra.mxu0 %v1417
    %v1519 = vpop.f32.mrf.mxu0
    %v1520 = vadd.f32 0.0, %v1519
    %v1521 = vpop.f32.mrf.mxu0
    %1522 = vdwg.mxu0
    %v1523 = vrcp.pop %v1485
    %v1524 = vmul.f32 %v1403, %v1523
    %v1525 = vrcp.pop %v1490
    %v1526 = vmul.f32 %v1405, %v1525
    %v1527 = vrcp.pop %v1495
    %v1528 = vmul.f32 %v1407, %v1527
    %v1529 = vrcp.pop %v1500
    %v1530 = vmul.f32 %v1409, %v1529
    %v1531 = vrcp.pop %v1505
    %v1532 = vmul.f32 %v1411, %v1531
    %v1533 = vrcp.pop %v1510
    %v1534 = vmul.f32 %v1413, %v1533
    %v1535 = vrcp.pop %v1515
    %v1536 = vmul.f32 %v1415, %v1535
    %v1537 = vrcp.pop %v1520
    %v1538 = vmul.f32 %v1417, %v1537
    %v1539 = vmul.f32 %v784, %v1524
    %v1540 = vmul.f32 %v784, %v1526
    %v1541 = vmul.f32 %v784, %v1528
    %v1542 = vmul.f32 %v784, %v1530
    %v1543 = vmul.f32 %v784, %v1532
    %v1544 = vmul.f32 %v784, %v1534
    %v1545 = vmul.f32 %v784, %v1536
    %v1546 = vmul.f32 %v784, %v1538
    %v1547 = vadd.f32 %v793, %v1539
    %v1548 = vadd.f32 %v793, %v1540
    %v1549 = vadd.f32 %v793, %v1541
    %v1550 = vadd.f32 %v793, %v1542
    %v1551 = vadd.f32 %v793, %v1543
    %v1552 = vadd.f32 %v793, %v1544
    %v1553 = vadd.f32 %v793, %v1545
    %v1554 = vadd.f32 %v793, %v1546
    %v1555 = vmul.f32 %v995, %v1547
    %v1556 = vmul.f32 %v1000, %v1548
    %v1557 = vmul.f32 %v1005, %v1549
    %v1558 = vmul.f32 %v1010, %v1550
    %v1559 = vmul.f32 %v1015, %v1551
    %v1560 = vmul.f32 %v1020, %v1552
    %v1561 = vmul.f32 %v1025, %v1553
    %v1562 = vmul.f32 %v1030, %v1554
    %1563 = vmatprep.subr.mxu0 0.0
    %1564 = vmatpush1.msra.mxu0 %v112
    %1565 = vmatprep.subr.mxu0 0.0
    %1566 = vmatpush1.msra.mxu0 %v111
    %1567 = vmatprep.subr.mxu0 0.0
    %1568 = vmatpush1.msra.mxu0 %v110
    %1569 = vmatprep.subr.mxu0 0.0
    %1570 = vmatpush1.msra.mxu0 %v109
    %1571 = vmatprep.subr.mxu0 0.0
    %1572 = vmatpush1.msra.mxu0 %v108
    %1573 = vmatprep.subr.mxu0 0.0
    %1574 = vmatpush1.msra.mxu0 %v107
    %1575 = vmatprep.subr.mxu0 0.0
    %1576 = vmatpush1.msra.mxu0 %v106
    %1577 = vmatprep.subr.mxu0 0.0
    %1578 = vmatpush1.msra.mxu0 %v105
    %1579 = vmatprep.subr.mxu0 0.0
    %1580 = vmatpush1.msra.mxu0 %v104
    %1581 = vmatprep.subr.mxu0 0.0
    %1582 = vmatpush1.msra.mxu0 %v103
    %1583 = vmatprep.subr.mxu0 0.0
    %1584 = vmatpush1.msra.mxu0 %v102
    %1585 = vmatprep.subr.mxu0 0.0
    %1586 = vmatpush1.msra.mxu0 %v101
    %1587 = vmatprep.subr.mxu0 0.0
    %1588 = vmatpush1.msra.mxu0 %v100
    %1589 = vmatprep.subr.mxu0 0.0
    %1590 = vmatpush1.msra.mxu0 %v99
    %1591 = vmatprep.subr.mxu0 0.0
    %1592 = vmatpush1.msra.mxu0 %v98
    %1593 = vmatprep.subr.mxu0 0.0
    %1594 = vmatpush1.msra.mxu0 %v97
    %1595 = vmatprep.subr.mxu0 0.0
    %1596 = vmatpush2.msra.mxu0 0.0
    %1597 = vmatprep.subr.mxu0 0.0
    %1598 = vmatpush2.msra.mxu0 0.0
    %1599 = vmatprep.subr.mxu0 0.0
    %1600 = vmatpush2.msra.mxu0 0.0
    %1601 = vmatprep.subr.mxu0 0.0
    %1602 = vmatpush2.msra.mxu0 0.0
    %1603 = vmatprep.subr.mxu0 0.0
    %1604 = vmatpush2.msra.mxu0 0.0
    %1605 = vmatprep.subr.mxu0 0.0
    %1606 = vmatpush2.msra.mxu0 0.0
    %1607 = vmatprep.subr.mxu0 0.0
    %1608 = vmatpush2.msra.mxu0 0.0
    %1609 = vmatprep.subr.mxu0 0.0
    %1610 = vmatpush2.msra.mxu0 0.0
    %1611 = vmatprep.subr.mxu0 0.0
    %1612 = vmatpush2.msra.mxu0 0.0
    %1613 = vmatprep.subr.mxu0 0.0
    %1614 = vmatpush2.msra.mxu0 0.0
    %1615 = vmatprep.subr.mxu0 0.0
    %1616 = vmatpush2.msra.mxu0 0.0
    %1617 = vmatprep.subr.mxu0 0.0
    %1618 = vmatpush2.msra.mxu0 0.0
    %1619 = vmatprep.subr.mxu0 0.0
    %1620 = vmatpush2.msra.mxu0 0.0
    %1621 = vmatprep.subr.mxu0 0.0
    %1622 = vmatpush2.msra.mxu0 0.0
    %1623 = vmatprep.subr.mxu0 0.0
    %1624 = vmatpush2.msra.mxu0 0.0
    %1625 = vmatprep.subr.mxu0 0.0
    %1626 = vmatpush2.msra.mxu0 0.0
    %1627 = vmatprep.mubr.f32.mxu0 0.0
    %1628 = vmatmul.mubr.f32.gmra.mxu0 %v1555
    %v1629 = vpop.f32.mrf.mxu0
    %v1630 = vadd.f32 %v113, %v1629
    %v1631 = vpop.f32.mrf.mxu0
    %1632 = vmatprep.mubr.f32.mxu0 0.0
    %1633 = vmatmul.mubr.f32.gmra.mxu0 %v1556
    %v1634 = vpop.f32.mrf.mxu0
    %v1635 = vadd.f32 %v114, %v1634
    %v1636 = vpop.f32.mrf.mxu0
    %1637 = vmatprep.mubr.f32.mxu0 0.0
    %1638 = vmatmul.mubr.f32.gmra.mxu0 %v1557
    %v1639 = vpop.f32.mrf.mxu0
    %v1640 = vadd.f32 %v115, %v1639
    %v1641 = vpop.f32.mrf.mxu0
    %1642 = vmatprep.mubr.f32.mxu0 0.0
    %1643 = vmatmul.mubr.f32.gmra.mxu0 %v1558
    %v1644 = vpop.f32.mrf.mxu0
    %v1645 = vadd.f32 %v116, %v1644
    %v1646 = vpop.f32.mrf.mxu0
    %1647 = vmatprep.mubr.f32.mxu0 0.0
    %1648 = vmatmul.mubr.f32.gmra.mxu0 %v1559
    %v1649 = vpop.f32.mrf.mxu0
    %v1650 = vadd.f32 %v117, %v1649
    %v1651 = vpop.f32.mrf.mxu0
    %1652 = vmatprep.mubr.f32.mxu0 0.0
    %1653 = vmatmul.mubr.f32.gmra.mxu0 %v1560
    %v1654 = vpop.f32.mrf.mxu0
    %v1655 = vadd.f32 %v118, %v1654
    %v1656 = vpop.f32.mrf.mxu0
    %1657 = vmatprep.mubr.f32.mxu0 0.0
    %1658 = vmatmul.mubr.f32.gmra.mxu0 %v1561
    %v1659 = vpop.f32.mrf.mxu0
    %v1660 = vadd.f32 %v119, %v1659
    %v1661 = vpop.f32.mrf.mxu0
    %1662 = vmatprep.mubr.f32.mxu0 0.0
    %1663 = vmatmul.mubr.f32.gmra.mxu0 %v1562
    %v1664 = vpop.f32.mrf.mxu0
    %v1665 = vadd.f32 %v120, %v1664
    %v1666 = vpop.f32.mrf.mxu0
    %1667 = vdwg.mxu0
    %1676 = vrot.lane.b32.xlu0 %v1630, 64
    %v1677 = vpop.permute.xlu0 %1676
    %1678 = vrot.lane.b32.xlu0 %v1635, 64
    %v1679 = vpop.permute.xlu0 %1678
    %1680 = vrot.lane.b32.xlu0 %v1640, 64
    %v1681 = vpop.permute.xlu0 %1680
    %1682 = vrot.lane.b32.xlu0 %v1645, 64
    %v1683 = vpop.permute.xlu0 %1682
    %1684 = vrot.lane.b32.xlu0 %v1650, 64
    %v1685 = vpop.permute.xlu0 %1684
    %1686 = vrot.lane.b32.xlu0 %v1655, 64
    %v1687 = vpop.permute.xlu0 %1686
    %1688 = vrot.lane.b32.xlu0 %v1660, 64
    %v1689 = vpop.permute.xlu0 %1688
    %1690 = vrot.lane.b32.xlu0 %v1665, 64
    %v1691 = vpop.permute.xlu0 %1690
    %vm1700 = vcmask 1048064
    %1701 = vst.msk [vmem:[#allocation8] sm:$0xff] %vm1700, %v1677
    %1702 = vst.msk [vmem:[#allocation8 + $0x8] sm:$0xff] %vm1700, %v1679
    %1703 = vst.msk [vmem:[#allocation8 + $0x10] sm:$0xff] %vm1700, %v1681
    %1704 = vst.msk [vmem:[#allocation8 + $0x18] sm:$0xff] %vm1700, %v1683
    %1705 = vst.msk [vmem:[#allocation8 + $0x20] sm:$0xff] %vm1700, %v1685
    %1706 = vst.msk [vmem:[#allocation8 + $0x28] sm:$0xff] %vm1700, %v1687
    %1707 = vst.msk [vmem:[#allocation8 + $0x30] sm:$0xff] %vm1700, %v1689
    %1708 = vst.msk [vmem:[#allocation8 + $0x38] sm:$0xff] %vm1700, %v1691
    // Predicated region
    $region38: #{tpu_custom_call.1} parent=1 // pred_check
      _
    $region39: #{tpu_custom_call.1} parent=1 // pred_check_branch
      %1710 = sbr.rel (0) target = $region41
    $region40: #{tpu_custom_call.1} parent=1 // pred_region
      %s1712 = ssub.s32 1024, 1024
      %1713 = vsyncadd [#allocation5], %s1712
      %s1714 = sshll.u32 [#allocation8], 4
      %s1715 = int_to_ptr.vmem [resolvable:$true] %s1714
      %1720 = dma.vmem_to_hbm [thread:$0]  %s1715, 1024, %s7, [#allocation5], 128, 128, 8
    $region41: #{tpu_custom_call.1} parent=1 // pred_fallthru
      _
    // Predicated region
    $region42: #{tpu_custom_call.1} parent=1 // pred_check
      _
    $region43: #{tpu_custom_call.1} parent=1 // pred_check_branch
      %1722 = sbr.rel (0) target = $region45
    $region44: #{tpu_custom_call.1} parent=1 // pred_region
      %1723 = dma.done [#allocation5], 1024
    $region45: #{tpu_custom_call.1} parent=1 // pred_fallthru
      _
    %1724 = vsyncpa [#allocation4], 1
    %1725 = vsyncpa [#allocation7], 1
    %1726 = vsyncpa [#allocation5], 1

</llo_original>
